<compile_context>
chip_gen: v7x
topology: tpu7x:2x2x1
jax: 0.10.0
libtpu: 0.0.40
codegen_flags: <defaults>
</compile_context>

<pallas_src>
import functools

import jax
import jax.numpy as jnp
from jax import lax
from jax.experimental import pallas as pl
from jax.experimental.pallas import tpu as pltpu

_INV_SQRT2 = 0.7071067811865476


def _erf(x):
    # Abramowitz & Stegun 7.1.26 rational approximation of erf, |error| <= 1.5e-7.
    ax = jnp.abs(x)
    t = 1.0 / (1.0 + 0.3275911 * ax)
    poly = t * (0.254829592 + t * (-0.284496736 + t * (1.421413741
               + t * (-1.453152027 + t * 1.061405429))))
    y = 1.0 - poly * jnp.exp(-(ax * ax))
    return jnp.where(x < 0.0, -y, y)


def _gelu_exact(x):
    # nn.GELU() default (approximate='none'): 0.5 * x * (1 + erf(x / sqrt(2)))
    return 0.5 * x * (1.0 + _erf(x * jnp.float32(_INV_SQRT2)))


def _seg_pos(shape, period):
    """Row position within each length-`period` segment (int32, full `shape`)."""
    idx = lax.broadcasted_iota(jnp.int32, shape, 0)
    if period & (period - 1) == 0:
        return idx & (period - 1)
    return idx % period            # TODO(synk): non-pow2 segment lengths use vector rem


def _shift_rows(x, d, pos, seg_len):
    """Row r gets x[r + d] from within its own segment; out-of-segment rows -> 0."""
    rows = x.shape[0]
    y = x if d == 0 else pltpu.roll(x, shift=(-d) % rows, axis=0)
    if d > 0:
        y = jnp.where(pos < seg_len - d, y, 0.0)
    elif d < 0:
        y = jnp.where(pos >= -d, y, 0.0)
    return y


def _conv_layers_kernel(x_ref, w1_ref, b1_ref, w2_ref, b2_ref, o_ref,
                        a1_s, a2_s, *, L, K1, K2, C1):
    # Per grid step (one block of B batch elements):
    #   x_ref:  (1, B*L, Cin)        w1_ref: (K1*Cin, Cw)  b1_ref: (1, Cw)
    #   w2_ref: (Cw, C2)             b2_ref: (1, C2)       o_ref:  (1, B*L2, C2)
    #   scratch: a1_s (B*L, Cw), a2_s (B*L1, C2)           (Cw >= K2*C1, lane-rounded)
    R = x_ref.shape[1]
    Cin = x_ref.shape[2]
    P1 = (K1 - 1) // 2
    P2 = (K2 - 1) // 2
    L1 = L // 2
    L2 = L1 // 2
    B = R // L
    R1 = B * L1
    R2 = B * L2

    # ---- Conv1d(Cin, C1, k=K1, pad=P1): taps in registers, accumulate K1 dots ------------
    # Weights are zero-padded to Cw output columns so the activation already lives in the
    # wide container conv2's im2col needs (cols >= C1 stay exactly zero).
    x = x_ref[0]                                            # (R, Cin)
    pos = _seg_pos((R, Cin), L)
    a1 = b1_ref[...]                                        # (1, Cw), broadcasts over rows
    for t in range(K1):
        tap = _shift_rows(x, t - P1, pos, L)                # (R, Cin)
        a1 = a1 + jnp.dot(tap, w1_ref[t * Cin:(t + 1) * Cin, :],
                          preferred_element_type=jnp.float32,
                          precision=lax.Precision.HIGHEST)
    a1_s[...] = a1                                          # (R, Cw)

    # ---- MaxPool1d(2) + exact GELU --------------------------------------------------------
    m1 = jnp.maximum(a1_s[pl.ds(0, R1, stride=2), :],
                     a1_s[pl.ds(1, R1, stride=2), :])       # (R1, Cw)
    h1 = _gelu_exact(m1)                                    # zero cols stay exactly zero

    # ---- Conv1d(C1, C2, k=K2, pad=P2): ONE (R1, Cw) x (Cw, C2) matmul ----------------------
    # The im2col operand is assembled by lane-rolling the zero-padded h1 into tap t's column
    # group [t*C1, (t+1)*C1) and summing the disjoint placements (XLU rolls, no concat).
    pos1 = _seg_pos((R1, h1.shape[1]), L1)
    slab2 = None
    for t in range(K2):
        piece = _shift_rows(h1, t - P2, pos1, L1)           # (R1, Cw)
        if t * C1:
            piece = pltpu.roll(piece, shift=t * C1, axis=1)
        slab2 = piece if slab2 is None else slab2 + piece
    a2_s[...] = jnp.dot(slab2, w2_ref[...],
                        preferred_element_type=jnp.float32,
                        precision=lax.Precision.HIGHEST) + b2_ref[...]

    # ---- MaxPool1d(2) ----------------------------------------------------------------------
    o_ref[0] = jnp.maximum(a2_s[pl.ds(0, R2, stride=2), :],
                           a2_s[pl.ds(1, R2, stride=2), :])


def conv_layers_forward(x_ncl, w1, b1, w2, b2, *, rows_target=256):
    """x_ncl: (N, Cin, L) float32 (PyTorch NCL). Returns (N, C2, L // 4)."""
    N, Cin, L = x_ncl.shape
    C1, _, K1 = w1.shape
    C2, _, K2 = w2.shape
    if L % 4 != 0:
        # TODO(synk): odd-length MaxPool1d (floor semantics) needs per-segment compaction;
        # the flat even/odd pooling below assumes L % 4 == 0.
        raise ValueError("conv_layers_forward requires L % 4 == 0")
    L1, L2 = L // 2, L // 4
    Cw = -(-(K2 * C1) // 128) * 128           # wide activation container, lane-rounded

    # Batch block: ~rows_target im2col rows per step (multiple of 128 & 256), but keep
    # >= 2 grid steps whenever N >= 2 so v7x's two TensorCores both get work.
    B = max(1, min(N, rows_target // L)) if L <= rows_target else 1
    if N >= 2:
        B = min(B, -(-N // 2))
    nblk = -(-N // B)
    n_pad = nblk * B

    x_nlc = jnp.transpose(x_ncl, (0, 2, 1)).astype(jnp.float32)          # (N, L, Cin)
    if n_pad != N:
        x_nlc = jnp.pad(x_nlc, ((0, n_pad - N), (0, 0), (0, 0)))
    x_blk = x_nlc.reshape(nblk, B * L, Cin)

    # (Cout, Cin, k) -> rows ordered (t, cin): row t*Cin + ci holds w[:, ci, t];
    # output columns zero-padded to the wide container.
    w1_rows = jnp.transpose(w1, (2, 1, 0)).reshape(K1 * Cin, C1).astype(jnp.float32)
    w1_wide = jnp.zeros((K1 * Cin, Cw), jnp.float32).at[:, :C1].set(w1_rows)
    b1_wide = jnp.zeros((1, Cw), jnp.float32).at[:, :C1].set(
        b1.reshape(1, C1).astype(jnp.float32))
    w2_rows = jnp.transpose(w2, (2, 1, 0)).reshape(K2 * C1, C2).astype(jnp.float32)
    w2_wide = jnp.zeros((Cw, C2), jnp.float32).at[:K2 * C1, :].set(w2_rows)
    b2_row = b2.reshape(1, C2).astype(jnp.float32)

    kernel = functools.partial(_conv_layers_kernel, L=L, K1=K1, K2=K2, C1=C1)
    out_blk = pl.pallas_call(
        kernel,
        out_shape=jax.ShapeDtypeStruct((nblk, B * L2, C2), jnp.float32),
        grid=(nblk,),
        in_specs=[
            pl.BlockSpec((1, B * L, Cin), lambda i: (i, 0, 0)),
            pl.BlockSpec((K1 * Cin, Cw), lambda i: (0, 0)),
            pl.BlockSpec((1, Cw), lambda i: (0, 0)),
            pl.BlockSpec((Cw, C2), lambda i: (0, 0)),
            pl.BlockSpec((1, C2), lambda i: (0, 0)),
        ],
        out_specs=pl.BlockSpec((1, B * L2, C2), lambda i: (i, 0, 0)),
        scratch_shapes=[
            pltpu.VMEM((B * L, Cw), jnp.float32),      # conv1 activations (pre-pool)
            pltpu.VMEM((B * L1, C2), jnp.float32),     # conv2 activations (pre-pool)
        ],
        compiler_params=pltpu.CompilerParams(
            dimension_semantics=("parallel",),          # batch blocks across TensorCores
            vmem_limit_bytes=32 * 1024 * 1024),         # well within v5e/v6e/v7x budgets
    )(x_blk, w1_wide, b1_wide, w2_wide, b2_row)

    out = out_blk.reshape(n_pad, L2, C2)[:N]
    # TODO(synk): emit a lane-dense (C2, L2-block) output in-kernel and drop this transpose.
    return jnp.transpose(out, (0, 2, 1))                # back to NCL: (N, C2, L2)


def _reference(x_ncl, w1, b1, w2, b2):
    """Pure-JAX (XLA) reference matching the PyTorch module."""
    dn = ('NCH', 'OIH', 'NCH')
    y = lax.conv_general_dilated(x_ncl, w1, (1,), [(1, 1)], dimension_numbers=dn,
                                 precision=lax.Precision.HIGHEST)
    y = y + b1[None, :, None]
    y = jnp.max(y.reshape(y.shape[0], y.shape[1], -1, 2), axis=-1)       # MaxPool1d(2)
    y = 0.5 * y * (1.0 + lax.erf(y * jnp.float32(_INV_SQRT2)))           # GELU (exact)
    y = lax.conv_general_dilated(y, w2, (1,), [(2, 2)], dimension_numbers=dn,
                                 precision=lax.Precision.HIGHEST)
    y = y + b2[None, :, None]
    y = jnp.max(y.reshape(y.shape[0], y.shape[1], -1, 2), axis=-1)       # MaxPool1d(2)
    return y


if __name__ == "__main__":
    key = jax.random.PRNGKey(0)
    kx, k1, k2, k3, k4 = jax.random.split(key, 5)

    N, Cin, L = 2, 4, 16
    C1, C2 = 20, 10

    # Deterministic synthetic parameters (shapes from the module's __init__).
    x = jax.random.normal(kx, (N, Cin, L), jnp.float32)
    w1 = jax.random.normal(k1, (C1, Cin, 3), jnp.float32) / jnp.sqrt(jnp.float32(Cin * 3))
    b1 = jax.random.normal(k2, (C1,), jnp.float32) * jnp.float32(0.1)
    w2 = jax.random.normal(k3, (C2, C1, 5), jnp.float32) / jnp.sqrt(jnp.float32(C1 * 5))
    b2 = jax.random.normal(k4, (C2,), jnp.float32) * jnp.float32(0.1)

    fwd = jax.jit(conv_layers_forward)
    out = jax.block_until_ready(fwd(x, w1, b1, w2, b2))
    assert out.shape == (N, C2, L // 4), out.shape

    ref = jax.block_until_ready(_reference(x, w1, b1, w2, b2))
    max_err = float(jnp.max(jnp.abs(out - ref)))
    assert max_err < 1e-4, f"max abs err {max_err}"

    print("KERNEL_OK")
</pallas_src>

<mosaic_0001>
module attributes {stable_mosaic.version = 11 : i64} {
  func.func @_conv_layers_kernel(%arg0: i32, %arg1: memref<1x16x4xf32, #tpu.memory_space<vmem>>, %arg2: memref<12x128xf32, #tpu.memory_space<vmem>>, %arg3: memref<1x128xf32, #tpu.memory_space<vmem>>, %arg4: memref<128x10xf32, #tpu.memory_space<vmem>>, %arg5: memref<1x10xf32, #tpu.memory_space<vmem>>, %arg6: memref<1x4x10xf32, #tpu.memory_space<vmem>>, %arg7: memref<16x128xf32, #tpu.memory_space<vmem>>, %arg8: memref<8x10xf32, #tpu.memory_space<vmem>>) attributes {dimension_semantics = [#tpu.dimension_semantics<parallel>], iteration_bounds = array<i64: 2>, scalar_prefetch = 0 : i64, scratch_operands = 2 : i64, tpu.core_type = #tpu.core_type<tc>, window_params = [{transform_indices = @transform_0, window_bounds = array<i64: 1, 16, 4>}, {pipeline_mode = #tpu.pipeline_mode<synchronous>, transform_indices = @transform_1, window_bounds = array<i64: 12, 128>}, {pipeline_mode = #tpu.pipeline_mode<synchronous>, transform_indices = @transform_2, window_bounds = array<i64: 1, 128>}, {pipeline_mode = #tpu.pipeline_mode<synchronous>, transform_indices = @transform_3, window_bounds = array<i64: 128, 10>}, {pipeline_mode = #tpu.pipeline_mode<synchronous>, transform_indices = @transform_4, window_bounds = array<i64: 1, 10>}, {transform_indices = @transform_5, window_bounds = array<i64: 1, 4, 10>}]} {
    %c0 = arith.constant 0 : index
    %c0_0 = arith.constant 0 : index
    %c0_1 = arith.constant 0 : index
    %0 = vector.load %arg1[%c0, %c0_0, %c0_1] : memref<1x16x4xf32, #tpu.memory_space<vmem>>, vector<1x16x4xf32>
    %1 = vector.shape_cast %0 : vector<1x16x4xf32> to vector<16x4xf32>
    %2 = tpu.iota {dimensions = array<i32: 0>} : vector<16x4xi32>
    %c15_i32 = arith.constant 15 : i32
    %3 = vector.broadcast %c15_i32 : i32 to vector<16x4xi32>
    %4 = arith.andi %2, %3 : vector<16x4xi32>
    %c0_2 = arith.constant 0 : index
    %c0_3 = arith.constant 0 : index
    %5 = vector.load %arg3[%c0_2, %c0_3] : memref<1x128xf32, #tpu.memory_space<vmem>>, vector<1x128xf32>
    %c1_i32 = arith.constant 1 : i32
    %6 = tpu.dynamic_rotate %1 by %c1_i32 dim 0 : vector<16x4xf32>, i32 -> vector<16x4xf32>
    %c1_i32_4 = arith.constant 1 : i32
    %7 = vector.broadcast %c1_i32_4 : i32 to vector<16x4xi32>
    %8 = arith.cmpi sge, %4, %7 : vector<16x4xi32>
    %cst = arith.constant 0.000000e+00 : f32
    %9 = vector.broadcast %cst : f32 to vector<16x4xf32>
    %10 = arith.select %8, %6, %9 : vector<16x4xi1>, vector<16x4xf32>
    %c0_5 = arith.constant 0 : index
    %c0_6 = arith.constant 0 : index
    %11 = vector.load %arg2[%c0_5, %c0_6] : memref<12x128xf32, #tpu.memory_space<vmem>>, vector<4x128xf32>
    %cst_7 = arith.constant dense<0.000000e+00> : vector<16x128xf32>
    %12 = tpu.matmul %10, %11, %cst_7 {dimension_numbers = #tpu.dot_dimension_numbers<[1], [0], [0], [1], [0, 0, 1, 1], [], []>, precision = #tpu.contract_precision<fp32>} : vector<16x4xf32>, vector<4x128xf32>, vector<16x128xf32> -> vector<16x128xf32>
    %13 = vector.broadcast %5 : vector<1x128xf32> to vector<16x128xf32>
    %14 = arith.addf %13, %12 : vector<16x128xf32>
    %c4 = arith.constant 4 : index
    %c0_8 = arith.constant 0 : index
    %15 = vector.load %arg2[%c4, %c0_8] : memref<12x128xf32, #tpu.memory_space<vmem>>, vector<4x128xf32>
    %cst_9 = arith.constant dense<0.000000e+00> : vector<16x128xf32>
    %16 = tpu.matmul %1, %15, %cst_9 {dimension_numbers = #tpu.dot_dimension_numbers<[1], [0], [0], [1], [0, 0, 1, 1], [], []>, precision = #tpu.contract_precision<fp32>} : vector<16x4xf32>, vector<4x128xf32>, vector<16x128xf32> -> vector<16x128xf32>
    %17 = arith.addf %14, %16 : vector<16x128xf32>
    %c15_i32_10 = arith.constant 15 : i32
    %18 = tpu.dynamic_rotate %1 by %c15_i32_10 dim 0 : vector<16x4xf32>, i32 -> vector<16x4xf32>
    %c15_i32_11 = arith.constant 15 : i32
    %19 = vector.broadcast %c15_i32_11 : i32 to vector<16x4xi32>
    %20 = arith.cmpi slt, %4, %19 : vector<16x4xi32>
    %cst_12 = arith.constant 0.000000e+00 : f32
    %21 = vector.broadcast %cst_12 : f32 to vector<16x4xf32>
    %22 = arith.select %20, %18, %21 : vector<16x4xi1>, vector<16x4xf32>
    %c8 = arith.constant 8 : index
    %c0_13 = arith.constant 0 : index
    %23 = vector.load %arg2[%c8, %c0_13] : memref<12x128xf32, #tpu.memory_space<vmem>>, vector<4x128xf32>
    %cst_14 = arith.constant dense<0.000000e+00> : vector<16x128xf32>
    %24 = tpu.matmul %22, %23, %cst_14 {dimension_numbers = #tpu.dot_dimension_numbers<[1], [0], [0], [1], [0, 0, 1, 1], [], []>, precision = #tpu.contract_precision<fp32>} : vector<16x4xf32>, vector<4x128xf32>, vector<16x128xf32> -> vector<16x128xf32>
    %25 = arith.addf %17, %24 : vector<16x128xf32>
    %c0_15 = arith.constant 0 : index
    %c0_16 = arith.constant 0 : index
    %26 = vector.load %arg7[%c0_15, %c0_16] : memref<16x128xf32, #tpu.memory_space<vmem>>, vector<16x128xf32>
    tpu.vector_store %arg7[%c0_15, %c0_16], %25 {strides = array<i32>} : memref<16x128xf32, #tpu.memory_space<vmem>>, vector<16x128xf32>,
    %c0_17 = arith.constant 0 : index
    %c0_18 = arith.constant 0 : index
    %27 = tpu.strided_load %arg7[%c0_17, %c0_18] {strides = array<i32: 2, 1>} : memref<16x128xf32, #tpu.memory_space<vmem>>, vector<8x128xf32>
    %c1 = arith.constant 1 : index
    %c0_19 = arith.constant 0 : index
    %28 = tpu.strided_load %arg7[%c1, %c0_19] {strides = array<i32: 2, 1>} : memref<16x128xf32, #tpu.memory_space<vmem>>, vector<8x128xf32>
    %29 = arith.maximumf %27, %28 : vector<8x128xf32>
    %cst_20 = arith.constant 5.000000e-01 : f32
    %30 = vector.broadcast %cst_20 : f32 to vector<8x128xf32>
    %31 = arith.mulf %30, %29 : vector<8x128xf32>
    %cst_21 = arith.constant 0.707106769 : f32
    %32 = vector.broadcast %cst_21 : f32 to vector<8x128xf32>
    %33 = arith.mulf %29, %32 : vector<8x128xf32>
    %34 = math.absf %33 : vector<8x128xf32>
    %cst_22 = arith.constant 0.327591091 : f32
    %35 = vector.broadcast %cst_22 : f32 to vector<8x128xf32>
    %36 = arith.mulf %35, %34 : vector<8x128xf32>
    %cst_23 = arith.constant 1.000000e+00 : f32
    %37 = vector.broadcast %cst_23 : f32 to vector<8x128xf32>
    %38 = arith.addf %37, %36 : vector<8x128xf32>
    %cst_24 = arith.constant 1.000000e+00 : f32
    %39 = vector.broadcast %cst_24 : f32 to vector<8x128xf32>
    %40 = arith.divf %39, %38 : vector<8x128xf32>
    %cst_25 = arith.constant 1.06140542 : f32
    %41 = vector.broadcast %cst_25 : f32 to vector<8x128xf32>
    %42 = arith.mulf %40, %41 : vector<8x128xf32>
    %cst_26 = arith.constant -1.45315206 : f32
    %43 = vector.broadcast %cst_26 : f32 to vector<8x128xf32>
    %44 = arith.addf %43, %42 : vector<8x128xf32>
    %45 = arith.mulf %40, %44 : vector<8x128xf32>
    %cst_27 = arith.constant 1.42141378 : f32
    %46 = vector.broadcast %cst_27 : f32 to vector<8x128xf32>
    %47 = arith.addf %46, %45 : vector<8x128xf32>
    %48 = arith.mulf %40, %47 : vector<8x128xf32>
    %cst_28 = arith.constant -0.284496725 : f32
    %49 = vector.broadcast %cst_28 : f32 to vector<8x128xf32>
    %50 = arith.addf %49, %48 : vector<8x128xf32>
    %51 = arith.mulf %40, %50 : vector<8x128xf32>
    %cst_29 = arith.constant 0.254829586 : f32
    %52 = vector.broadcast %cst_29 : f32 to vector<8x128xf32>
    %53 = arith.addf %52, %51 : vector<8x128xf32>
    %54 = arith.mulf %40, %53 : vector<8x128xf32>
    %55 = arith.mulf %34, %34 : vector<8x128xf32>
    %cst_30 = arith.constant 0.000000e+00 : f32
    %56 = vector.broadcast %cst_30 : f32 to vector<8x128xf32>
    %57 = arith.subf %56, %55 : vector<8x128xf32>
    %58 = math.exp %57 : vector<8x128xf32>
    %59 = arith.mulf %54, %58 : vector<8x128xf32>
    %cst_31 = arith.constant 1.000000e+00 : f32
    %60 = vector.broadcast %cst_31 : f32 to vector<8x128xf32>
    %61 = arith.subf %60, %59 : vector<8x128xf32>
    %cst_32 = arith.constant 0.000000e+00 : f32
    %62 = vector.broadcast %cst_32 : f32 to vector<8x128xf32>
    %63 = arith.cmpf olt, %33, %62 : vector<8x128xf32>
    %cst_33 = arith.constant 0.000000e+00 : f32
    %64 = vector.broadcast %cst_33 : f32 to vector<8x128xf32>
    %65 = arith.subf %64, %61 : vector<8x128xf32>
    %66 = arith.select %63, %65, %61 : vector<8x128xi1>, vector<8x128xf32>
    %cst_34 = arith.constant 1.000000e+00 : f32
    %67 = vector.broadcast %cst_34 : f32 to vector<8x128xf32>
    %68 = arith.addf %67, %66 : vector<8x128xf32>
    %69 = arith.mulf %31, %68 : vector<8x128xf32>
    %70 = tpu.iota {dimensions = array<i32: 0>} : vector<8x128xi32>
    %c7_i32 = arith.constant 7 : i32
    %71 = vector.broadcast %c7_i32 : i32 to vector<8x128xi32>
    %72 = arith.andi %70, %71 : vector<8x128xi32>
    %c2_i32 = arith.constant 2 : i32
    %73 = tpu.dynamic_rotate %69 by %c2_i32 dim 0 : vector<8x128xf32>, i32 -> vector<8x128xf32>
    %c2_i32_35 = arith.constant 2 : i32
    %74 = vector.broadcast %c2_i32_35 : i32 to vector<8x128xi32>
    %75 = arith.cmpi sge, %72, %74 : vector<8x128xi32>
    %cst_36 = arith.constant 0.000000e+00 : f32
    %76 = vector.broadcast %cst_36 : f32 to vector<8x128xf32>
    %77 = arith.select %75, %73, %76 : vector<8x128xi1>, vector<8x128xf32>
    %c1_i32_37 = arith.constant 1 : i32
    %78 = tpu.dynamic_rotate %69 by %c1_i32_37 dim 0 : vector<8x128xf32>, i32 -> vector<8x128xf32>
    %c1_i32_38 = arith.constant 1 : i32
    %79 = vector.broadcast %c1_i32_38 : i32 to vector<8x128xi32>
    %80 = arith.cmpi sge, %72, %79 : vector<8x128xi32>
    %cst_39 = arith.constant 0.000000e+00 : f32
    %81 = vector.broadcast %cst_39 : f32 to vector<8x128xf32>
    %82 = arith.select %80, %78, %81 : vector<8x128xi1>, vector<8x128xf32>
    %c20_i32 = arith.constant 20 : i32
    %83 = tpu.dynamic_rotate %82 by %c20_i32 dim 1 : vector<8x128xf32>, i32 -> vector<8x128xf32>
    %84 = arith.addf %77, %83 : vector<8x128xf32>
    %c40_i32 = arith.constant 40 : i32
    %85 = tpu.dynamic_rotate %69 by %c40_i32 dim 1 : vector<8x128xf32>, i32 -> vector<8x128xf32>
    %86 = arith.addf %84, %85 : vector<8x128xf32>
    %c7_i32_40 = arith.constant 7 : i32
    %87 = tpu.dynamic_rotate %69 by %c7_i32_40 dim 0 : vector<8x128xf32>, i32 -> vector<8x128xf32>
    %c7_i32_41 = arith.constant 7 : i32
    %88 = vector.broadcast %c7_i32_41 : i32 to vector<8x128xi32>
    %89 = arith.cmpi slt, %72, %88 : vector<8x128xi32>
    %cst_42 = arith.constant 0.000000e+00 : f32
    %90 = vector.broadcast %cst_42 : f32 to vector<8x128xf32>
    %91 = arith.select %89, %87, %90 : vector<8x128xi1>, vector<8x128xf32>
    %c60_i32 = arith.constant 60 : i32
    %92 = tpu.dynamic_rotate %91 by %c60_i32 dim 1 : vector<8x128xf32>, i32 -> vector<8x128xf32>
    %93 = arith.addf %86, %92 : vector<8x128xf32>
    %c6_i32 = arith.constant 6 : i32
    %94 = tpu.dynamic_rotate %69 by %c6_i32 dim 0 : vector<8x128xf32>, i32 -> vector<8x128xf32>
    %c6_i32_43 = arith.constant 6 : i32
    %95 = vector.broadcast %c6_i32_43 : i32 to vector<8x128xi32>
    %96 = arith.cmpi slt, %72, %95 : vector<8x128xi32>
    %cst_44 = arith.constant 0.000000e+00 : f32
    %97 = vector.broadcast %cst_44 : f32 to vector<8x128xf32>
    %98 = arith.select %96, %94, %97 : vector<8x128xi1>, vector<8x128xf32>
    %c80_i32 = arith.constant 80 : i32
    %99 = tpu.dynamic_rotate %98 by %c80_i32 dim 1 : vector<8x128xf32>, i32 -> vector<8x128xf32>
    %100 = arith.addf %93, %99 : vector<8x128xf32>
    %c0_45 = arith.constant 0 : index
    %c0_46 = arith.constant 0 : index
    %101 = vector.load %arg4[%c0_45, %c0_46] : memref<128x10xf32, #tpu.memory_space<vmem>>, vector<128x10xf32>
    %cst_47 = arith.constant dense<0.000000e+00> : vector<8x10xf32>
    %102 = tpu.matmul %100, %101, %cst_47 {dimension_numbers = #tpu.dot_dimension_numbers<[1], [0], [0], [1], [0, 0, 1, 1], [], []>, precision = #tpu.contract_precision<fp32>} : vector<8x128xf32>, vector<128x10xf32>, vector<8x10xf32> -> vector<8x10xf32>
    %c0_48 = arith.constant 0 : index
    %c0_49 = arith.constant 0 : index
    %103 = vector.load %arg5[%c0_48, %c0_49] : memref<1x10xf32, #tpu.memory_space<vmem>>, vector<1x10xf32>
    %104 = vector.broadcast %103 : vector<1x10xf32> to vector<8x10xf32>
    %105 = arith.addf %102, %104 : vector<8x10xf32>
    %c0_50 = arith.constant 0 : index
    %c0_51 = arith.constant 0 : index
    %106 = vector.load %arg8[%c0_50, %c0_51] : memref<8x10xf32, #tpu.memory_space<vmem>>, vector<8x10xf32>
    tpu.vector_store %arg8[%c0_50, %c0_51], %105 {strides = array<i32>} : memref<8x10xf32, #tpu.memory_space<vmem>>, vector<8x10xf32>,
    %c0_52 = arith.constant 0 : index
    %c0_53 = arith.constant 0 : index
    %107 = tpu.strided_load %arg8[%c0_52, %c0_53] {strides = array<i32: 2, 1>} : memref<8x10xf32, #tpu.memory_space<vmem>>, vector<4x10xf32>
    %c1_54 = arith.constant 1 : index
    %c0_55 = arith.constant 0 : index
    %108 = tpu.strided_load %arg8[%c1_54, %c0_55] {strides = array<i32: 2, 1>} : memref<8x10xf32, #tpu.memory_space<vmem>>, vector<4x10xf32>
    %109 = arith.maximumf %107, %108 : vector<4x10xf32>
    %c0_56 = arith.constant 0 : index
    %c0_57 = arith.constant 0 : index
    %c0_58 = arith.constant 0 : index
    %110 = vector.load %arg6[%c0_56, %c0_57, %c0_58] : memref<1x4x10xf32, #tpu.memory_space<vmem>>, vector<1x4x10xf32>
    %111 = vector.shape_cast %110 : vector<1x4x10xf32> to vector<4x10xf32>
    %112 = vector.shape_cast %109 : vector<4x10xf32> to vector<1x4x10xf32>
    tpu.vector_store %arg6[%c0_56, %c0_57, %c0_58], %112 {strides = array<i32>} : memref<1x4x10xf32, #tpu.memory_space<vmem>>, vector<1x4x10xf32>,
    return
  }
  func.func @transform_0(%arg0: i32) -> (i32, i32, i32) {
    %c0_i32 = arith.constant 0 : i32
    %c0_i32_0 = arith.constant 0 : i32
    %c0_i32_1 = arith.constant 0 : i32
    return %arg0, %c0_i32, %c0_i32_0 : i32, i32, i32
  }
  func.func @transform_1(%arg0: i32) -> (i32, i32) {
    %c0_i32 = arith.constant 0 : i32
    %c0_i32_0 = arith.constant 0 : i32
    %c0_i32_1 = arith.constant 0 : i32
    return %c0_i32, %c0_i32_0 : i32, i32
  }
  func.func @transform_2(%arg0: i32) -> (i32, i32) {
    %c0_i32 = arith.constant 0 : i32
    %c0_i32_0 = arith.constant 0 : i32
    %c0_i32_1 = arith.constant 0 : i32
    return %c0_i32, %c0_i32_0 : i32, i32
  }
  func.func @transform_3(%arg0: i32) -> (i32, i32) {
    %c0_i32 = arith.constant 0 : i32
    %c0_i32_0 = arith.constant 0 : i32
    %c0_i32_1 = arith.constant 0 : i32
    return %c0_i32, %c0_i32_0 : i32, i32
  }
  func.func @transform_4(%arg0: i32) -> (i32, i32) {
    %c0_i32 = arith.constant 0 : i32
    %c0_i32_0 = arith.constant 0 : i32
    %c0_i32_1 = arith.constant 0 : i32
    return %c0_i32, %c0_i32_0 : i32, i32
  }
  func.func @transform_5(%arg0: i32) -> (i32, i32, i32) {
    %c0_i32 = arith.constant 0 : i32
    %c0_i32_0 = arith.constant 0 : i32
    %c0_i32_1 = arith.constant 0 : i32
    return %arg0, %c0_i32, %c0_i32_0 : i32, i32, i32
  }
}

</mosaic_0001>

<llo_original>
// kernel: conv_layers_forward.1
$region0: #{conv_layers_forward.1}
  #allocation0 [shape = 'u32[]', space=smem, size = 0x4, offset = 0x4, fixed_abs, tag = 'smem constant byte address 0x4 - core index']
  #allocation1 [shape = 'u32[144,128]{1,0:T(1,128)}', space=vmem, size = 0x12000, scoped, tag = 'internal scratch']
  #allocation2 [shape = 'f32[16,128]{1,0:T(8,128)}', space=vmem, size = 0x2000, scoped, tag = 'scratch operand']
  #allocation3 [shape = 'f32[8,10]{1,0:T(8,128)}', space=vmem, size = 0x1000, scoped, tag = 'scratch operand']
  %s0 = inlined_call_operand.vmem [shape: f32[2,16,4], index: 0, kind: input, shape index: {}]
  %s1 = inlined_call_operand.vmem [shape: f32[12,128], index: 1, kind: input, shape index: {}]
  %s2 = inlined_call_operand.vmem [shape: f32[1,128], index: 2, kind: input, shape index: {}]
  %s3 = inlined_call_operand.vmem [shape: f32[128,10], index: 3, kind: input, shape index: {}]
  %s4 = inlined_call_operand.vmem [shape: f32[1,10], index: 4, kind: input, shape index: {}]
  %s5 = inlined_call_operand.hbm [shape: f32[2,4,10], index: 5, kind: output, shape index: {}]
  %s6 = sld [smem:[#allocation0]]
  $region53: #{conv_layers_forward.1} parent=0
    _
  %s8 = ssub.s32 1, %s6
  %s9 = scalar_select 0, %s8, %s6
  $region1: #{conv_layers_forward.1} parent=0
    #allocation4 [shape = 'u8[4096]{0}', space=vmem, size = 0x1000, scoped, tag = 'output window, operand 0']
    #allocation5 [shape = 's32[2]{0}', space=sflag, size = 0x8, scoped, tag = 'scoped memory for conv_layers_forward.1']
    %10 = vsyncpa [#allocation5], 0
    %s11 = scalar_lea.sflag [#allocation5], 1
    %12 = vsyncpa %s11, 0
    loop: start=0, step=1, limit=4
    $region2: #{conv_layers_forward.1} parent=1 // loop_pre_header
      _
    $region3: #{conv_layers_forward.1} parent=1 // loop_header
      %s14 = sphi 0, %s18
      %p15 = scmp.ge.s32.totalorder %s14, 4
      %s24 = sphi 0, %s26
      %s27 = sphi 0, %s24
      %s28 = sphi 0, %s27
      %s44 = sphi 0, %s28
      %s48 = sphi 0, %s48
      %s50 = sphi 0, %s48
      %s51 = sphi 0, %s50
      %s65 = sphi 0, %s51
      %s69 = sphi 0, %s69
      %s71 = sphi 0, %s69
      %s72 = sphi 0, %s71
      %s86 = sphi 0, %s72
      %s90 = sphi 0, %s90
      %s92 = sphi 0, %s90
      %s93 = sphi 0, %s92
      %s107 = sphi 0, %s93
      %s111 = sphi 0, %s111
      %s113 = sphi 0, %s111
      %s114 = sphi 0, %s113
      %s128 = sphi 0, %s114
      %s134 = sphi 0, %s136
      %s137 = sphi 0, %s134
      %s138 = sphi 0, %s137
      %s154 = sphi 0, %s138
    $region4: #{conv_layers_forward.1} parent=1 // loop_header_branch
      %17 = sbr.rel (%p15) target = $region8
    $region5: #{conv_layers_forward.1} parent=1 // loop_body
      %s19 = ssub.s32 %s14, 1
      %s20 = ssub.s32 %s14, 2
      %s21 = sadd.s32 %s14, 1
      %s22 = ssub.s32 %s14, %s21
      %p23 = scmp.eq.s32.totalorder %s22, 0
      %s25 = sadd.s32 %s24, 1
      %s26 = scalar_select %p23, %s24, %s25
      %p29 = pneg %p23
      %p30 = scmp.eq.s32.totalorder %s14, 1
      %p31 = por %p29, %p30
      %p32 = scmp.ne.s32.totalorder %s24, %s27
      %p33 = scmp.eq.s32.totalorder %s14, 0
      %p34 = por %p32, %p33
      %p35 = scmp.ne.s32.totalorder %s24, %s27
      %p36 = scmp.eq.s32.totalorder %s19, 1
      %p37 = por %p35, %p36
      %p38 = scmp.ne.s32.totalorder %s27, %s28
      %p39 = scmp.eq.s32.totalorder %s19, 0
      %p40 = por %p38, %p39
      %p41 = scmp.ne.s32.totalorder %s27, %s28
      %p42 = scmp.eq.s32.totalorder %s20, 1
      %p43 = por %p41, %p42
      %p45 = scmp.ne.s32.totalorder %s28, %s44
      %p46 = scmp.eq.s32.totalorder %s20, 0
      %p47 = por %p45, %p46
      %s49 = sadd.s32 %s48, 1
      %p52 = scmp.eq.s32.totalorder %s14, 1
      %p53 = scmp.ne.s32.totalorder %s48, %s50
      %p54 = scmp.eq.s32.totalorder %s14, 0
      %p55 = por %p53, %p54
      %p56 = scmp.ne.s32.totalorder %s48, %s50
      %p57 = scmp.eq.s32.totalorder %s19, 1
      %p58 = por %p56, %p57
      %p59 = scmp.ne.s32.totalorder %s50, %s51
      %p60 = scmp.eq.s32.totalorder %s19, 0
      %p61 = por %p59, %p60
      %p62 = scmp.ne.s32.totalorder %s50, %s51
      %p63 = scmp.eq.s32.totalorder %s20, 1
      %p64 = por %p62, %p63
      %p66 = scmp.ne.s32.totalorder %s51, %s65
      %p67 = scmp.eq.s32.totalorder %s20, 0
      %p68 = por %p66, %p67
      %s70 = sadd.s32 %s69, 1
      %p73 = scmp.eq.s32.totalorder %s14, 1
      %p74 = scmp.ne.s32.totalorder %s69, %s71
      %p75 = scmp.eq.s32.totalorder %s14, 0
      %p76 = por %p74, %p75
      %p77 = scmp.ne.s32.totalorder %s69, %s71
      %p78 = scmp.eq.s32.totalorder %s19, 1
      %p79 = por %p77, %p78
      %p80 = scmp.ne.s32.totalorder %s71, %s72
      %p81 = scmp.eq.s32.totalorder %s19, 0
      %p82 = por %p80, %p81
      %p83 = scmp.ne.s32.totalorder %s71, %s72
      %p84 = scmp.eq.s32.totalorder %s20, 1
      %p85 = por %p83, %p84
      %p87 = scmp.ne.s32.totalorder %s72, %s86
      %p88 = scmp.eq.s32.totalorder %s20, 0
      %p89 = por %p87, %p88
      %s91 = sadd.s32 %s90, 1
      %p94 = scmp.eq.s32.totalorder %s14, 1
      %p95 = scmp.ne.s32.totalorder %s90, %s92
      %p96 = scmp.eq.s32.totalorder %s14, 0
      %p97 = por %p95, %p96
      %p98 = scmp.ne.s32.totalorder %s90, %s92
      %p99 = scmp.eq.s32.totalorder %s19, 1
      %p100 = por %p98, %p99
      %p101 = scmp.ne.s32.totalorder %s92, %s93
      %p102 = scmp.eq.s32.totalorder %s19, 0
      %p103 = por %p101, %p102
      %p104 = scmp.ne.s32.totalorder %s92, %s93
      %p105 = scmp.eq.s32.totalorder %s20, 1
      %p106 = por %p104, %p105
      %p108 = scmp.ne.s32.totalorder %s93, %s107
      %p109 = scmp.eq.s32.totalorder %s20, 0
      %p110 = por %p108, %p109
      %s112 = sadd.s32 %s111, 1
      %p115 = scmp.eq.s32.totalorder %s14, 1
      %p116 = scmp.ne.s32.totalorder %s111, %s113
      %p117 = scmp.eq.s32.totalorder %s14, 0
      %p118 = por %p116, %p117
      %p119 = scmp.ne.s32.totalorder %s111, %s113
      %p120 = scmp.eq.s32.totalorder %s19, 1
      %p121 = por %p119, %p120
      %p122 = scmp.ne.s32.totalorder %s113, %s114
      %p123 = scmp.eq.s32.totalorder %s19, 0
      %p124 = por %p122, %p123
      %p125 = scmp.ne.s32.totalorder %s113, %s114
      %p126 = scmp.eq.s32.totalorder %s20, 1
      %p127 = por %p125, %p126
      %p129 = scmp.ne.s32.totalorder %s114, %s128
      %p130 = scmp.eq.s32.totalorder %s20, 0
      %p131 = por %p129, %p130
      %s132 = ssub.s32 %s14, %s21
      %p133 = scmp.eq.s32.totalorder %s132, 0
      %s135 = sadd.s32 %s134, 1
      %s136 = scalar_select %p133, %s134, %s135
      %p139 = pneg %p133
      %p140 = scmp.eq.s32.totalorder %s14, 1
      %p141 = por %p139, %p140
      %p142 = scmp.ne.s32.totalorder %s134, %s137
      %p143 = scmp.eq.s32.totalorder %s14, 0
      %p144 = por %p142, %p143
      %p145 = scmp.ne.s32.totalorder %s134, %s137
      %p146 = scmp.eq.s32.totalorder %s19, 1
      %p147 = por %p145, %p146
      %p148 = scmp.ne.s32.totalorder %s137, %s138
      %p149 = scmp.eq.s32.totalorder %s19, 0
      %p150 = por %p148, %p149
      %p151 = scmp.ne.s32.totalorder %s137, %s138
      %p152 = scmp.eq.s32.totalorder %s20, 1
      %p153 = por %p151, %p152
      %p155 = scmp.ne.s32.totalorder %s138, %s154
      %p156 = scmp.eq.s32.totalorder %s20, 0
      %p157 = por %p155, %p156
      %p158 = scmp.le.s32.totalorder 1, %s14
      %p159 = scmp.lt.s32.totalorder %s14, 3
      %p160 = pnand %p158, %p159
      %p161 = pneg %p160
      // Predicated region
      $region9: #{conv_layers_forward.1} parent=5 // pred_check
        _
      $region10: #{conv_layers_forward.1} parent=5 // pred_check_branch
        %163 = sbr.rel (%p160) target = $region12
      $region11: #{conv_layers_forward.1} parent=5 // pred_region
        %s164 = ssub.s32 %s14, 1
        // Predicated region
        $region13: #{conv_layers_forward.1} parent=11 // pred_check
          %p165 = pneg %p61
        $region14: #{conv_layers_forward.1} parent=11 // pred_check_branch
          %167 = sbr.rel (%p165) target = $region16
        $region15: #{conv_layers_forward.1} parent=11 // pred_region
          _
        $region16: #{conv_layers_forward.1} parent=11 // pred_fallthru
          _
        // Predicated region
        $region17: #{conv_layers_forward.1} parent=11 // pred_check
          %p168 = pneg %p82
        $region18: #{conv_layers_forward.1} parent=11 // pred_check_branch
          %170 = sbr.rel (%p168) target = $region20
        $region19: #{conv_layers_forward.1} parent=11 // pred_region
          _
        $region20: #{conv_layers_forward.1} parent=11 // pred_fallthru
          _
        // Predicated region
        $region21: #{conv_layers_forward.1} parent=11 // pred_check
          %p171 = pneg %p103
        $region22: #{conv_layers_forward.1} parent=11 // pred_check_branch
          %173 = sbr.rel (%p171) target = $region24
        $region23: #{conv_layers_forward.1} parent=11 // pred_region
          _
        $region24: #{conv_layers_forward.1} parent=11 // pred_fallthru
          _
        // Predicated region
        $region25: #{conv_layers_forward.1} parent=11 // pred_check
          %p174 = pneg %p124
        $region26: #{conv_layers_forward.1} parent=11 // pred_check_branch
          %176 = sbr.rel (%p174) target = $region28
        $region27: #{conv_layers_forward.1} parent=11 // pred_region
          _
        $region28: #{conv_layers_forward.1} parent=11 // pred_fallthru
          _
      $region12: #{conv_layers_forward.1} parent=5 // pred_fallthru
        _
      %p177 = scmp.lt.s32.totalorder %s14, 2
      // Predicated region
      $region29: #{conv_layers_forward.1} parent=5 // pred_check
        %p178 = pneg %p177
      $region30: #{conv_layers_forward.1} parent=5 // pred_check_branch
        %180 = sbr.rel (%p178) target = $region32
      $region31: #{conv_layers_forward.1} parent=5 // pred_region
        // Predicated region
        $region33: #{conv_layers_forward.1} parent=31 // pred_check
          %p181 = pneg %p34
        $region34: #{conv_layers_forward.1} parent=31 // pred_check_branch
          %183 = sbr.rel (%p181) target = $region36
        $region35: #{conv_layers_forward.1} parent=31 // pred_region
          %p184 = scmp.lt.s32.totalorder %s14, 1
          %s185 = scalar_select %p184, %s14, 1
          %s186 = smul.addr %s185, 2
          %s187 = smul.addr %s186, 8
          %s188 = scalar_lea.vmem %s0, %s187
        $region36: #{conv_layers_forward.1} parent=31 // pred_fallthru
          _
      $region32: #{conv_layers_forward.1} parent=5 // pred_fallthru
        _
      %p189 = scmp.le.s32.totalorder 1, %s14
      %p190 = scmp.lt.s32.totalorder %s14, 3
      %p191 = pnand %p189, %p190
      %p192 = pneg %p191
      // Predicated region
      $region37: #{conv_layers_forward.1} parent=5 // pred_check
        _
      $region38: #{conv_layers_forward.1} parent=5 // pred_check_branch
        %194 = sbr.rel (%p191) target = $region40
      $region39: #{conv_layers_forward.1} parent=5 // pred_region
        %s195 = ssub.s32 %s14, 1
        %p196 = scmp.lt.s32.totalorder %s19, 1
        %s197 = scalar_select %p196, %s19, 1
        %s198 = smul.addr %s197, 2
        %s199 = smul.addr %s198, 8
        %s200 = scalar_lea.vmem %s0, %s199
        %p201 = pneg %p40
        %p202 = pneg %p37
        %p203 = pneg %p61
        %p204 = pneg %p58
        %p205 = pneg %p82
        %p206 = pneg %p79
        %p207 = pneg %p103
        %p208 = pneg %p100
        %p209 = pneg %p124
        %p210 = pneg %p121
        %p211 = pneg %p150
        %p212 = pneg %p147
        %s213 = sand.u32 %s137, 1
        %s214 = scalar_lea.sflag [#allocation5], %s213
        %s215 = sand.u32 %s137, 1
        %s216 = smul.addr %s215, 4
        %s217 = scalar_lea.vmem [#allocation4], %s216
        %p218 = scmp.lt.s32.totalorder %s19, 1
        %s219 = scalar_select %p218, %s19, 1
        %s220 = smul.addr %s219, 2
        %s221 = smul.addr %s220, 8
        %s222 = scalar_lea.vmem %s0, %s221
        %v223 = vld [vmem:[%s222] sm:$0xff]
        %v224 = vld [vmem:[%s222 + $0x8] sm:$0xff]
        %v225 = vlaneseq
        %v226 = vshrl.u32 %v225, 7
        %v227 = vadd.s32 %v226, 8
        %v228 = vand.u32 %v226, 15
        %v229 = vand.u32 %v227, 15
        %v230 = vld [vmem:[%s2] sm:$0x1]
        %v231 = vrot.slane %v223, 7
        %v232 = vrot.slane %v224, 7
        %vm233 = vcmp.lt.s32.totalorder %v226, 1
        %v234 = vsel %vm233, %v231, %v232
        %v235 = vsel %vm233, %v232, %v231
        %vm236 = vcmp.ge.s32.totalorder %v228, 1
        %vm237 = vcmp.ge.s32.totalorder %v229, 1
        %v238 = vsel %vm236, %v235, 0.0
        %v239 = vsel %vm237, %v234, 0.0
        %v240 = vld [vmem:[%s1] sm:$0xf]
        %vm241 = vcmask 31744
        %v243 = vsel %vm241, %v238, 0
        %v246 = vsel %vm241, %v239, 0
        %vm248 = vcmask 1043456
        %v250 = vsel %vm248, %v240, 0
        %252 = vmatprep.subr.mxu0 0.0
        %v253 = vand.u32 %v250, 4294901760
        %254 = vmatpush1.msra.mxu0 %v253
        %255 = vmatprep.subr.mxu0 0.0
        %256 = vmatpush1.msra.mxu0 0.0
        %257 = vmatprep.subr.mxu0 0.0
        %258 = vmatpush1.msra.mxu0 0.0
        %259 = vmatprep.subr.mxu0 0.0
        %260 = vmatpush1.msra.mxu0 0.0
        %261 = vmatprep.subr.mxu0 0.0
        %262 = vmatpush1.msra.mxu0 0.0
        %263 = vmatprep.subr.mxu0 0.0
        %264 = vmatpush1.msra.mxu0 0.0
        %265 = vmatprep.subr.mxu0 0.0
        %266 = vmatpush1.msra.mxu0 0.0
        %267 = vmatprep.subr.mxu0 0.0
        %268 = vmatpush1.msra.mxu0 0.0
        %269 = vmatprep.subr.mxu0 0.0
        %270 = vmatpush1.msra.mxu0 0.0
        %271 = vmatprep.subr.mxu0 0.0
        %272 = vmatpush1.msra.mxu0 0.0
        %273 = vmatprep.subr.mxu0 0.0
        %274 = vmatpush1.msra.mxu0 0.0
        %275 = vmatprep.subr.mxu0 0.0
        %276 = vmatpush1.msra.mxu0 0.0
        %277 = vmatprep.subr.mxu0 0.0
        %278 = vmatpush1.msra.mxu0 0.0
        %279 = vmatprep.subr.mxu0 0.0
        %280 = vmatpush1.msra.mxu0 0.0
        %281 = vmatprep.subr.mxu0 0.0
        %282 = vmatpush1.msra.mxu0 0.0
        %283 = vmatprep.subr.mxu0 0.0
        %284 = vmatpush1.msra.mxu0 0.0
        %285 = vmatprep.subr.mxu0 0.0
        %286 = vmatpush1.msra.mxu0 0.0
        %287 = vmatprep.subr.mxu0 0.0
        %288 = vmatpush1.msra.mxu0 0.0
        %289 = vmatprep.subr.mxu0 0.0
        %290 = vmatpush1.msra.mxu0 0.0
        %291 = vmatprep.subr.mxu0 0.0
        %292 = vmatpush1.msra.mxu0 0.0
        %293 = vmatprep.subr.mxu0 0.0
        %294 = vmatpush1.msra.mxu0 0.0
        %295 = vmatprep.subr.mxu0 0.0
        %296 = vmatpush1.msra.mxu0 0.0
        %297 = vmatprep.subr.mxu0 0.0
        %298 = vmatpush1.msra.mxu0 0.0
        %299 = vmatprep.subr.mxu0 0.0
        %300 = vmatpush1.msra.mxu0 0.0
        %301 = vmatprep.subr.mxu0 0.0
        %302 = vmatpush1.msra.mxu0 0.0
        %303 = vmatprep.subr.mxu0 0.0
        %304 = vmatpush1.msra.mxu0 0.0
        %305 = vmatprep.subr.mxu0 0.0
        %306 = vmatpush1.msra.mxu0 0.0
        %307 = vmatprep.subr.mxu0 0.0
        %308 = vmatpush1.msra.mxu0 0.0
        %309 = vmatprep.subr.mxu0 0.0
        %310 = vmatpush1.msra.mxu0 0.0
        %311 = vmatprep.subr.mxu0 0.0
        %312 = vmatpush1.msra.mxu0 0.0
        %313 = vmatprep.subr.mxu0 0.0
        %314 = vmatpush1.msra.mxu0 0.0
        %315 = vmatprep.subr.mxu0 0.0
        %316 = vmatpush1.msra.mxu0 0.0
        %317 = vmatprep.mubr.f32.mxu0 0.0
        %v318 = vand.u32 %v243, 4294901760
        %v319 = vsub.f32 %v243, %v318
        %v320 = vand.u32 %v319, 4294901760
        %v321 = vsub.f32 %v319, %v320
        %v322 = vand.u32 %v321, 4294901760
        %323 = vmatmul.mubr.f32.gmra.mrb[0].mxu0 %v322
        %v324 = vpop.f32.mrb[0].mxu0
        %v325 = vadd.f32 0.0, %v324
        %v326 = vpop.f32.mrb[0].mxu0
        %327 = vmatprep.mubr.f32.mxu0 0.0
        %v328 = vand.u32 %v246, 4294901760
        %v329 = vsub.f32 %v246, %v328
        %v330 = vand.u32 %v329, 4294901760
        %v331 = vsub.f32 %v329, %v330
        %v332 = vand.u32 %v331, 4294901760
        %333 = vmatmul.mubr.f32.gmra.mrb[0].mxu0 %v332
        %v334 = vpop.f32.mrb[0].mxu0
        %v335 = vadd.f32 0.0, %v334
        %v336 = vpop.f32.mrb[0].mxu0
        %337 = vdwg.mxu0
        %338 = vmatprep.subr.mxu0 0.0
        %v339 = vand.u32 %v250, 4294901760
        %v340 = vsub.f32 %v250, %v339
        %v341 = vand.u32 %v340, 4294901760
        %v342 = vsub.f32 %v340, %v341
        %v343 = vand.u32 %v342, 4294901760
        %344 = vmatpush1.msra.mxu0 %v343
        %345 = vmatprep.subr.mxu0 0.0
        %346 = vmatpush1.msra.mxu0 0.0
        %347 = vmatprep.subr.mxu0 0.0
        %348 = vmatpush1.msra.mxu0 0.0
        %349 = vmatprep.subr.mxu0 0.0
        %350 = vmatpush1.msra.mxu0 0.0
        %351 = vmatprep.subr.mxu0 0.0
        %352 = vmatpush1.msra.mxu0 0.0
        %353 = vmatprep.subr.mxu0 0.0
        %354 = vmatpush1.msra.mxu0 0.0
        %355 = vmatprep.subr.mxu0 0.0
        %356 = vmatpush1.msra.mxu0 0.0
        %357 = vmatprep.subr.mxu0 0.0
        %358 = vmatpush1.msra.mxu0 0.0
        %359 = vmatprep.subr.mxu0 0.0
        %360 = vmatpush1.msra.mxu0 0.0
        %361 = vmatprep.subr.mxu0 0.0
        %362 = vmatpush1.msra.mxu0 0.0
        %363 = vmatprep.subr.mxu0 0.0
        %364 = vmatpush1.msra.mxu0 0.0
        %365 = vmatprep.subr.mxu0 0.0
        %366 = vmatpush1.msra.mxu0 0.0
        %367 = vmatprep.subr.mxu0 0.0
        %368 = vmatpush1.msra.mxu0 0.0
        %369 = vmatprep.subr.mxu0 0.0
        %370 = vmatpush1.msra.mxu0 0.0
        %371 = vmatprep.subr.mxu0 0.0
        %372 = vmatpush1.msra.mxu0 0.0
        %373 = vmatprep.subr.mxu0 0.0
        %374 = vmatpush1.msra.mxu0 0.0
        %375 = vmatprep.subr.mxu0 0.0
        %376 = vmatpush1.msra.mxu0 0.0
        %377 = vmatprep.subr.mxu0 0.0
        %378 = vmatpush1.msra.mxu0 0.0
        %379 = vmatprep.subr.mxu0 0.0
        %380 = vmatpush1.msra.mxu0 0.0
        %381 = vmatprep.subr.mxu0 0.0
        %382 = vmatpush1.msra.mxu0 0.0
        %383 = vmatprep.subr.mxu0 0.0
        %384 = vmatpush1.msra.mxu0 0.0
        %385 = vmatprep.subr.mxu0 0.0
        %386 = vmatpush1.msra.mxu0 0.0
        %387 = vmatprep.subr.mxu0 0.0
        %388 = vmatpush1.msra.mxu0 0.0
        %389 = vmatprep.subr.mxu0 0.0
        %390 = vmatpush1.msra.mxu0 0.0
        %391 = vmatprep.subr.mxu0 0.0
        %392 = vmatpush1.msra.mxu0 0.0
        %393 = vmatprep.subr.mxu0 0.0
        %394 = vmatpush1.msra.mxu0 0.0
        %395 = vmatprep.subr.mxu0 0.0
        %396 = vmatpush1.msra.mxu0 0.0
        %397 = vmatprep.subr.mxu0 0.0
        %398 = vmatpush1.msra.mxu0 0.0
        %399 = vmatprep.subr.mxu0 0.0
        %400 = vmatpush1.msra.mxu0 0.0
        %401 = vmatprep.subr.mxu0 0.0
        %402 = vmatpush1.msra.mxu0 0.0
        %403 = vmatprep.subr.mxu0 0.0
        %404 = vmatpush1.msra.mxu0 0.0
        %405 = vmatprep.subr.mxu0 0.0
        %406 = vmatpush1.msra.mxu0 0.0
        %407 = vmatprep.mubr.f32.mxu0 0.0
        %v408 = vand.u32 %v243, 4294901760
        %409 = vmatmul.mubr.f32.gmra.mrb[0].mxu0 %v408
        %v410 = vpop.f32.mrb[0].mxu0
        %v411 = vadd.f32 %v325, %v410
        %v412 = vpop.f32.mrb[0].mxu0
        %413 = vmatprep.mubr.f32.mxu0 0.0
        %v414 = vand.u32 %v246, 4294901760
        %415 = vmatmul.mubr.f32.gmra.mrb[0].mxu0 %v414
        %v416 = vpop.f32.mrb[0].mxu0
        %v417 = vadd.f32 %v335, %v416
        %v418 = vpop.f32.mrb[0].mxu0
        %419 = vdwg.mxu0
        %420 = vmatprep.subr.mxu0 0.0
        %v421 = vand.u32 %v250, 4294901760
        %v422 = vsub.f32 %v250, %v421
        %423 = vmatpush1.msra.mxu0 %v422
        %424 = vmatprep.subr.mxu0 0.0
        %425 = vmatpush1.msra.mxu0 0.0
        %426 = vmatprep.subr.mxu0 0.0
        %427 = vmatpush1.msra.mxu0 0.0
        %428 = vmatprep.subr.mxu0 0.0
        %429 = vmatpush1.msra.mxu0 0.0
        %430 = vmatprep.subr.mxu0 0.0
        %431 = vmatpush1.msra.mxu0 0.0
        %432 = vmatprep.subr.mxu0 0.0
        %433 = vmatpush1.msra.mxu0 0.0
        %434 = vmatprep.subr.mxu0 0.0
        %435 = vmatpush1.msra.mxu0 0.0
        %436 = vmatprep.subr.mxu0 0.0
        %437 = vmatpush1.msra.mxu0 0.0
        %438 = vmatprep.subr.mxu0 0.0
        %439 = vmatpush1.msra.mxu0 0.0
        %440 = vmatprep.subr.mxu0 0.0
        %441 = vmatpush1.msra.mxu0 0.0
        %442 = vmatprep.subr.mxu0 0.0
        %443 = vmatpush1.msra.mxu0 0.0
        %444 = vmatprep.subr.mxu0 0.0
        %445 = vmatpush1.msra.mxu0 0.0
        %446 = vmatprep.subr.mxu0 0.0
        %447 = vmatpush1.msra.mxu0 0.0
        %448 = vmatprep.subr.mxu0 0.0
        %449 = vmatpush1.msra.mxu0 0.0
        %450 = vmatprep.subr.mxu0 0.0
        %451 = vmatpush1.msra.mxu0 0.0
        %452 = vmatprep.subr.mxu0 0.0
        %453 = vmatpush1.msra.mxu0 0.0
        %454 = vmatprep.subr.mxu0 0.0
        %455 = vmatpush1.msra.mxu0 0.0
        %456 = vmatprep.subr.mxu0 0.0
        %457 = vmatpush1.msra.mxu0 0.0
        %458 = vmatprep.subr.mxu0 0.0
        %459 = vmatpush1.msra.mxu0 0.0
        %460 = vmatprep.subr.mxu0 0.0
        %461 = vmatpush1.msra.mxu0 0.0
        %462 = vmatprep.subr.mxu0 0.0
        %463 = vmatpush1.msra.mxu0 0.0
        %464 = vmatprep.subr.mxu0 0.0
        %465 = vmatpush1.msra.mxu0 0.0
        %466 = vmatprep.subr.mxu0 0.0
        %467 = vmatpush1.msra.mxu0 0.0
        %468 = vmatprep.subr.mxu0 0.0
        %469 = vmatpush1.msra.mxu0 0.0
        %470 = vmatprep.subr.mxu0 0.0
        %471 = vmatpush1.msra.mxu0 0.0
        %472 = vmatprep.subr.mxu0 0.0
        %473 = vmatpush1.msra.mxu0 0.0
        %474 = vmatprep.subr.mxu0 0.0
        %475 = vmatpush1.msra.mxu0 0.0
        %476 = vmatprep.subr.mxu0 0.0
        %477 = vmatpush1.msra.mxu0 0.0
        %478 = vmatprep.subr.mxu0 0.0
        %479 = vmatpush1.msra.mxu0 0.0
        %480 = vmatprep.subr.mxu0 0.0
        %481 = vmatpush1.msra.mxu0 0.0
        %482 = vmatprep.subr.mxu0 0.0
        %483 = vmatpush1.msra.mxu0 0.0
        %484 = vmatprep.subr.mxu0 0.0
        %485 = vmatpush1.msra.mxu0 0.0
        %486 = vmatprep.mubr.f32.mxu0 0.0
        %v487 = vand.u32 %v243, 4294901760
        %v488 = vsub.f32 %v243, %v487
        %489 = vmatmul.mubr.f32.gmra.mrb[0].mxu0 %v488
        %v490 = vpop.f32.mrb[0].mxu0
        %v491 = vadd.f32 %v411, %v490
        %v492 = vpop.f32.mrb[0].mxu0
        %493 = vmatprep.mubr.f32.mxu0 0.0
        %v494 = vand.u32 %v246, 4294901760
        %v495 = vsub.f32 %v246, %v494
        %496 = vmatmul.mubr.f32.gmra.mrb[0].mxu0 %v495
        %v497 = vpop.f32.mrb[0].mxu0
        %v498 = vadd.f32 %v417, %v497
        %v499 = vpop.f32.mrb[0].mxu0
        %500 = vdwg.mxu0
        %501 = vmatprep.subr.mxu0 0.0
        %v502 = vand.u32 %v250, 4294901760
        %503 = vmatpush1.msra.mxu0 %v502
        %504 = vmatprep.subr.mxu0 0.0
        %505 = vmatpush1.msra.mxu0 0.0
        %506 = vmatprep.subr.mxu0 0.0
        %507 = vmatpush1.msra.mxu0 0.0
        %508 = vmatprep.subr.mxu0 0.0
        %509 = vmatpush1.msra.mxu0 0.0
        %510 = vmatprep.subr.mxu0 0.0
        %511 = vmatpush1.msra.mxu0 0.0
        %512 = vmatprep.subr.mxu0 0.0
        %513 = vmatpush1.msra.mxu0 0.0
        %514 = vmatprep.subr.mxu0 0.0
        %515 = vmatpush1.msra.mxu0 0.0
        %516 = vmatprep.subr.mxu0 0.0
        %517 = vmatpush1.msra.mxu0 0.0
        %518 = vmatprep.subr.mxu0 0.0
        %519 = vmatpush1.msra.mxu0 0.0
        %520 = vmatprep.subr.mxu0 0.0
        %521 = vmatpush1.msra.mxu0 0.0
        %522 = vmatprep.subr.mxu0 0.0
        %523 = vmatpush1.msra.mxu0 0.0
        %524 = vmatprep.subr.mxu0 0.0
        %525 = vmatpush1.msra.mxu0 0.0
        %526 = vmatprep.subr.mxu0 0.0
        %527 = vmatpush1.msra.mxu0 0.0
        %528 = vmatprep.subr.mxu0 0.0
        %529 = vmatpush1.msra.mxu0 0.0
        %530 = vmatprep.subr.mxu0 0.0
        %531 = vmatpush1.msra.mxu0 0.0
        %532 = vmatprep.subr.mxu0 0.0
        %533 = vmatpush1.msra.mxu0 0.0
        %534 = vmatprep.subr.mxu0 0.0
        %535 = vmatpush1.msra.mxu0 0.0
        %536 = vmatprep.subr.mxu0 0.0
        %537 = vmatpush1.msra.mxu0 0.0
        %538 = vmatprep.subr.mxu0 0.0
        %539 = vmatpush1.msra.mxu0 0.0
        %540 = vmatprep.subr.mxu0 0.0
        %541 = vmatpush1.msra.mxu0 0.0
        %542 = vmatprep.subr.mxu0 0.0
        %543 = vmatpush1.msra.mxu0 0.0
        %544 = vmatprep.subr.mxu0 0.0
        %545 = vmatpush1.msra.mxu0 0.0
        %546 = vmatprep.subr.mxu0 0.0
        %547 = vmatpush1.msra.mxu0 0.0
        %548 = vmatprep.subr.mxu0 0.0
        %549 = vmatpush1.msra.mxu0 0.0
        %550 = vmatprep.subr.mxu0 0.0
        %551 = vmatpush1.msra.mxu0 0.0
        %552 = vmatprep.subr.mxu0 0.0
        %553 = vmatpush1.msra.mxu0 0.0
        %554 = vmatprep.subr.mxu0 0.0
        %555 = vmatpush1.msra.mxu0 0.0
        %556 = vmatprep.subr.mxu0 0.0
        %557 = vmatpush1.msra.mxu0 0.0
        %558 = vmatprep.subr.mxu0 0.0
        %559 = vmatpush1.msra.mxu0 0.0
        %560 = vmatprep.subr.mxu0 0.0
        %561 = vmatpush1.msra.mxu0 0.0
        %562 = vmatprep.subr.mxu0 0.0
        %563 = vmatpush1.msra.mxu0 0.0
        %564 = vmatprep.subr.mxu0 0.0
        %565 = vmatpush1.msra.mxu0 0.0
        %566 = vmatprep.mubr.f32.mxu0 0.0
        %v567 = vand.u32 %v243, 4294901760
        %v568 = vsub.f32 %v243, %v567
        %v569 = vand.u32 %v568, 4294901760
        %570 = vmatmul.mubr.f32.gmra.mrb[0].mxu0 %v569
        %v571 = vpop.f32.mrb[0].mxu0
        %v572 = vadd.f32 %v491, %v571
        %v573 = vpop.f32.mrb[0].mxu0
        %574 = vmatprep.mubr.f32.mxu0 0.0
        %v575 = vand.u32 %v246, 4294901760
        %v576 = vsub.f32 %v246, %v575
        %v577 = vand.u32 %v576, 4294901760
        %578 = vmatmul.mubr.f32.gmra.mrb[0].mxu0 %v577
        %v579 = vpop.f32.mrb[0].mxu0
        %v580 = vadd.f32 %v498, %v579
        %v581 = vpop.f32.mrb[0].mxu0
        %582 = vdwg.mxu0
        %583 = vmatprep.subr.mxu0 0.0
        %v584 = vand.u32 %v250, 4294901760
        %v585 = vsub.f32 %v250, %v584
        %v586 = vand.u32 %v585, 4294901760
        %587 = vmatpush1.msra.mxu0 %v586
        %588 = vmatprep.subr.mxu0 0.0
        %589 = vmatpush1.msra.mxu0 0.0
        %590 = vmatprep.subr.mxu0 0.0
        %591 = vmatpush1.msra.mxu0 0.0
        %592 = vmatprep.subr.mxu0 0.0
        %593 = vmatpush1.msra.mxu0 0.0
        %594 = vmatprep.subr.mxu0 0.0
        %595 = vmatpush1.msra.mxu0 0.0
        %596 = vmatprep.subr.mxu0 0.0
        %597 = vmatpush1.msra.mxu0 0.0
        %598 = vmatprep.subr.mxu0 0.0
        %599 = vmatpush1.msra.mxu0 0.0
        %600 = vmatprep.subr.mxu0 0.0
        %601 = vmatpush1.msra.mxu0 0.0
        %602 = vmatprep.subr.mxu0 0.0
        %603 = vmatpush1.msra.mxu0 0.0
        %604 = vmatprep.subr.mxu0 0.0
        %605 = vmatpush1.msra.mxu0 0.0
        %606 = vmatprep.subr.mxu0 0.0
        %607 = vmatpush1.msra.mxu0 0.0
        %608 = vmatprep.subr.mxu0 0.0
        %609 = vmatpush1.msra.mxu0 0.0
        %610 = vmatprep.subr.mxu0 0.0
        %611 = vmatpush1.msra.mxu0 0.0
        %612 = vmatprep.subr.mxu0 0.0
        %613 = vmatpush1.msra.mxu0 0.0
        %614 = vmatprep.subr.mxu0 0.0
        %615 = vmatpush1.msra.mxu0 0.0
        %616 = vmatprep.subr.mxu0 0.0
        %617 = vmatpush1.msra.mxu0 0.0
        %618 = vmatprep.subr.mxu0 0.0
        %619 = vmatpush1.msra.mxu0 0.0
        %620 = vmatprep.subr.mxu0 0.0
        %621 = vmatpush1.msra.mxu0 0.0
        %622 = vmatprep.subr.mxu0 0.0
        %623 = vmatpush1.msra.mxu0 0.0
        %624 = vmatprep.subr.mxu0 0.0
        %625 = vmatpush1.msra.mxu0 0.0
        %626 = vmatprep.subr.mxu0 0.0
        %627 = vmatpush1.msra.mxu0 0.0
        %628 = vmatprep.subr.mxu0 0.0
        %629 = vmatpush1.msra.mxu0 0.0
        %630 = vmatprep.subr.mxu0 0.0
        %631 = vmatpush1.msra.mxu0 0.0
        %632 = vmatprep.subr.mxu0 0.0
        %633 = vmatpush1.msra.mxu0 0.0
        %634 = vmatprep.subr.mxu0 0.0
        %635 = vmatpush1.msra.mxu0 0.0
        %636 = vmatprep.subr.mxu0 0.0
        %637 = vmatpush1.msra.mxu0 0.0
        %638 = vmatprep.subr.mxu0 0.0
        %639 = vmatpush1.msra.mxu0 0.0
        %640 = vmatprep.subr.mxu0 0.0
        %641 = vmatpush1.msra.mxu0 0.0
        %642 = vmatprep.subr.mxu0 0.0
        %643 = vmatpush1.msra.mxu0 0.0
        %644 = vmatprep.subr.mxu0 0.0
        %645 = vmatpush1.msra.mxu0 0.0
        %646 = vmatprep.subr.mxu0 0.0
        %647 = vmatpush1.msra.mxu0 0.0
        %648 = vmatprep.subr.mxu0 0.0
        %649 = vmatpush1.msra.mxu0 0.0
        %650 = vmatprep.mubr.f32.mxu0 0.0
        %v651 = vand.u32 %v243, 4294901760
        %652 = vmatmul.mubr.f32.gmra.mrb[0].mxu0 %v651
        %v653 = vpop.f32.mrb[0].mxu0
        %v654 = vadd.f32 %v572, %v653
        %v655 = vpop.f32.mrb[0].mxu0
        %656 = vmatprep.mubr.f32.mxu0 0.0
        %v657 = vand.u32 %v246, 4294901760
        %658 = vmatmul.mubr.f32.gmra.mrb[0].mxu0 %v657
        %v659 = vpop.f32.mrb[0].mxu0
        %v660 = vadd.f32 %v580, %v659
        %v661 = vpop.f32.mrb[0].mxu0
        %662 = vdwg.mxu0
        %663 = vmatprep.subr.mxu0 0.0
        %v664 = vand.u32 %v250, 4294901760
        %665 = vmatpush1.msra.mxu0 %v664
        %666 = vmatprep.subr.mxu0 0.0
        %667 = vmatpush1.msra.mxu0 0.0
        %668 = vmatprep.subr.mxu0 0.0
        %669 = vmatpush1.msra.mxu0 0.0
        %670 = vmatprep.subr.mxu0 0.0
        %671 = vmatpush1.msra.mxu0 0.0
        %672 = vmatprep.subr.mxu0 0.0
        %673 = vmatpush1.msra.mxu0 0.0
        %674 = vmatprep.subr.mxu0 0.0
        %675 = vmatpush1.msra.mxu0 0.0
        %676 = vmatprep.subr.mxu0 0.0
        %677 = vmatpush1.msra.mxu0 0.0
        %678 = vmatprep.subr.mxu0 0.0
        %679 = vmatpush1.msra.mxu0 0.0
        %680 = vmatprep.subr.mxu0 0.0
        %681 = vmatpush1.msra.mxu0 0.0
        %682 = vmatprep.subr.mxu0 0.0
        %683 = vmatpush1.msra.mxu0 0.0
        %684 = vmatprep.subr.mxu0 0.0
        %685 = vmatpush1.msra.mxu0 0.0
        %686 = vmatprep.subr.mxu0 0.0
        %687 = vmatpush1.msra.mxu0 0.0
        %688 = vmatprep.subr.mxu0 0.0
        %689 = vmatpush1.msra.mxu0 0.0
        %690 = vmatprep.subr.mxu0 0.0
        %691 = vmatpush1.msra.mxu0 0.0
        %692 = vmatprep.subr.mxu0 0.0
        %693 = vmatpush1.msra.mxu0 0.0
        %694 = vmatprep.subr.mxu0 0.0
        %695 = vmatpush1.msra.mxu0 0.0
        %696 = vmatprep.subr.mxu0 0.0
        %697 = vmatpush1.msra.mxu0 0.0
        %698 = vmatprep.subr.mxu0 0.0
        %699 = vmatpush1.msra.mxu0 0.0
        %700 = vmatprep.subr.mxu0 0.0
        %701 = vmatpush1.msra.mxu0 0.0
        %702 = vmatprep.subr.mxu0 0.0
        %703 = vmatpush1.msra.mxu0 0.0
        %704 = vmatprep.subr.mxu0 0.0
        %705 = vmatpush1.msra.mxu0 0.0
        %706 = vmatprep.subr.mxu0 0.0
        %707 = vmatpush1.msra.mxu0 0.0
        %708 = vmatprep.subr.mxu0 0.0
        %709 = vmatpush1.msra.mxu0 0.0
        %710 = vmatprep.subr.mxu0 0.0
        %711 = vmatpush1.msra.mxu0 0.0
        %712 = vmatprep.subr.mxu0 0.0
        %713 = vmatpush1.msra.mxu0 0.0
        %714 = vmatprep.subr.mxu0 0.0
        %715 = vmatpush1.msra.mxu0 0.0
        %716 = vmatprep.subr.mxu0 0.0
        %717 = vmatpush1.msra.mxu0 0.0
        %718 = vmatprep.subr.mxu0 0.0
        %719 = vmatpush1.msra.mxu0 0.0
        %720 = vmatprep.subr.mxu0 0.0
        %721 = vmatpush1.msra.mxu0 0.0
        %722 = vmatprep.subr.mxu0 0.0
        %723 = vmatpush1.msra.mxu0 0.0
        %724 = vmatprep.subr.mxu0 0.0
        %725 = vmatpush1.msra.mxu0 0.0
        %726 = vmatprep.subr.mxu0 0.0
        %727 = vmatpush1.msra.mxu0 0.0
        %728 = vmatprep.mubr.f32.mxu0 0.0
        %v729 = vand.u32 %v243, 4294901760
        %730 = vmatmul.mubr.f32.gmra.mrb[0].mxu0 %v729
        %v731 = vpop.f32.mrb[0].mxu0
        %v732 = vadd.f32 %v654, %v731
        %v733 = vpop.f32.mrb[0].mxu0
        %734 = vmatprep.mubr.f32.mxu0 0.0
        %v735 = vand.u32 %v246, 4294901760
        %736 = vmatmul.mubr.f32.gmra.mrb[0].mxu0 %v735
        %v737 = vpop.f32.mrb[0].mxu0
        %v738 = vadd.f32 %v660, %v737
        %v739 = vpop.f32.mrb[0].mxu0
        %740 = vdwg.mxu0
        %v742 = vlaneseq
        %v743 = vshrl.u32 %v742, 7
        %v744 = vsub.s32 0, %v743
        %v745 = vrot.slane %v230, %v744
        %v747 = vadd.f32 %v745, %v732
        %v748 = vadd.f32 %v745, %v738
        %v749 = vld [vmem:[%s1 + $0x4] sm:$0xf]
        %v751 = vsel %vm241, %v223, 0
        %v754 = vsel %vm241, %v224, 0
        %v757 = vsel %vm248, %v749, 0
        %759 = vmatprep.subr.mxu0 0.0
        %v760 = vand.u32 %v757, 4294901760
        %761 = vmatpush1.msra.mxu0 %v760
        %762 = vmatprep.subr.mxu0 0.0
        %763 = vmatpush1.msra.mxu0 0.0
        %764 = vmatprep.subr.mxu0 0.0
        %765 = vmatpush1.msra.mxu0 0.0
        %766 = vmatprep.subr.mxu0 0.0
        %767 = vmatpush1.msra.mxu0 0.0
        %768 = vmatprep.subr.mxu0 0.0
        %769 = vmatpush1.msra.mxu0 0.0
        %770 = vmatprep.subr.mxu0 0.0
        %771 = vmatpush1.msra.mxu0 0.0
        %772 = vmatprep.subr.mxu0 0.0
        %773 = vmatpush1.msra.mxu0 0.0
        %774 = vmatprep.subr.mxu0 0.0
        %775 = vmatpush1.msra.mxu0 0.0
        %776 = vmatprep.subr.mxu0 0.0
        %777 = vmatpush1.msra.mxu0 0.0
        %778 = vmatprep.subr.mxu0 0.0
        %779 = vmatpush1.msra.mxu0 0.0
        %780 = vmatprep.subr.mxu0 0.0
        %781 = vmatpush1.msra.mxu0 0.0
        %782 = vmatprep.subr.mxu0 0.0
        %783 = vmatpush1.msra.mxu0 0.0
        %784 = vmatprep.subr.mxu0 0.0
        %785 = vmatpush1.msra.mxu0 0.0
        %786 = vmatprep.subr.mxu0 0.0
        %787 = vmatpush1.msra.mxu0 0.0
        %788 = vmatprep.subr.mxu0 0.0
        %789 = vmatpush1.msra.mxu0 0.0
        %790 = vmatprep.subr.mxu0 0.0
        %791 = vmatpush1.msra.mxu0 0.0
        %792 = vmatprep.subr.mxu0 0.0
        %793 = vmatpush1.msra.mxu0 0.0
        %794 = vmatprep.subr.mxu0 0.0
        %795 = vmatpush1.msra.mxu0 0.0
        %796 = vmatprep.subr.mxu0 0.0
        %797 = vmatpush1.msra.mxu0 0.0
        %798 = vmatprep.subr.mxu0 0.0
        %799 = vmatpush1.msra.mxu0 0.0
        %800 = vmatprep.subr.mxu0 0.0
        %801 = vmatpush1.msra.mxu0 0.0
        %802 = vmatprep.subr.mxu0 0.0
        %803 = vmatpush1.msra.mxu0 0.0
        %804 = vmatprep.subr.mxu0 0.0
        %805 = vmatpush1.msra.mxu0 0.0
        %806 = vmatprep.subr.mxu0 0.0
        %807 = vmatpush1.msra.mxu0 0.0
        %808 = vmatprep.subr.mxu0 0.0
        %809 = vmatpush1.msra.mxu0 0.0
        %810 = vmatprep.subr.mxu0 0.0
        %811 = vmatpush1.msra.mxu0 0.0
        %812 = vmatprep.subr.mxu0 0.0
        %813 = vmatpush1.msra.mxu0 0.0
        %814 = vmatprep.subr.mxu0 0.0
        %815 = vmatpush1.msra.mxu0 0.0
        %816 = vmatprep.subr.mxu0 0.0
        %817 = vmatpush1.msra.mxu0 0.0
        %818 = vmatprep.subr.mxu0 0.0
        %819 = vmatpush1.msra.mxu0 0.0
        %820 = vmatprep.subr.mxu0 0.0
        %821 = vmatpush1.msra.mxu0 0.0
        %822 = vmatprep.subr.mxu0 0.0
        %823 = vmatpush1.msra.mxu0 0.0
        %824 = vmatprep.mubr.f32.mxu0 0.0
        %v825 = vand.u32 %v751, 4294901760
        %v826 = vsub.f32 %v751, %v825
        %v827 = vand.u32 %v826, 4294901760
        %v828 = vsub.f32 %v826, %v827
        %v829 = vand.u32 %v828, 4294901760
        %830 = vmatmul.mubr.f32.gmra.mrb[0].mxu0 %v829
        %v831 = vpop.f32.mrb[0].mxu0
        %v832 = vadd.f32 0.0, %v831
        %v833 = vpop.f32.mrb[0].mxu0
        %834 = vmatprep.mubr.f32.mxu0 0.0
        %v835 = vand.u32 %v754, 4294901760
        %v836 = vsub.f32 %v754, %v835
        %v837 = vand.u32 %v836, 4294901760
        %v838 = vsub.f32 %v836, %v837
        %v839 = vand.u32 %v838, 4294901760
        %840 = vmatmul.mubr.f32.gmra.mrb[0].mxu0 %v839
        %v841 = vpop.f32.mrb[0].mxu0
        %v842 = vadd.f32 0.0, %v841
        %v843 = vpop.f32.mrb[0].mxu0
        %844 = vdwg.mxu0
        %845 = vmatprep.subr.mxu0 0.0
        %v846 = vand.u32 %v757, 4294901760
        %v847 = vsub.f32 %v757, %v846
        %v848 = vand.u32 %v847, 4294901760
        %v849 = vsub.f32 %v847, %v848
        %v850 = vand.u32 %v849, 4294901760
        %851 = vmatpush1.msra.mxu0 %v850
        %852 = vmatprep.subr.mxu0 0.0
        %853 = vmatpush1.msra.mxu0 0.0
        %854 = vmatprep.subr.mxu0 0.0
        %855 = vmatpush1.msra.mxu0 0.0
        %856 = vmatprep.subr.mxu0 0.0
        %857 = vmatpush1.msra.mxu0 0.0
        %858 = vmatprep.subr.mxu0 0.0
        %859 = vmatpush1.msra.mxu0 0.0
        %860 = vmatprep.subr.mxu0 0.0
        %861 = vmatpush1.msra.mxu0 0.0
        %862 = vmatprep.subr.mxu0 0.0
        %863 = vmatpush1.msra.mxu0 0.0
        %864 = vmatprep.subr.mxu0 0.0
        %865 = vmatpush1.msra.mxu0 0.0
        %866 = vmatprep.subr.mxu0 0.0
        %867 = vmatpush1.msra.mxu0 0.0
        %868 = vmatprep.subr.mxu0 0.0
        %869 = vmatpush1.msra.mxu0 0.0
        %870 = vmatprep.subr.mxu0 0.0
        %871 = vmatpush1.msra.mxu0 0.0
        %872 = vmatprep.subr.mxu0 0.0
        %873 = vmatpush1.msra.mxu0 0.0
        %874 = vmatprep.subr.mxu0 0.0
        %875 = vmatpush1.msra.mxu0 0.0
        %876 = vmatprep.subr.mxu0 0.0
        %877 = vmatpush1.msra.mxu0 0.0
        %878 = vmatprep.subr.mxu0 0.0
        %879 = vmatpush1.msra.mxu0 0.0
        %880 = vmatprep.subr.mxu0 0.0
        %881 = vmatpush1.msra.mxu0 0.0
        %882 = vmatprep.subr.mxu0 0.0
        %883 = vmatpush1.msra.mxu0 0.0
        %884 = vmatprep.subr.mxu0 0.0
        %885 = vmatpush1.msra.mxu0 0.0
        %886 = vmatprep.subr.mxu0 0.0
        %887 = vmatpush1.msra.mxu0 0.0
        %888 = vmatprep.subr.mxu0 0.0
        %889 = vmatpush1.msra.mxu0 0.0
        %890 = vmatprep.subr.mxu0 0.0
        %891 = vmatpush1.msra.mxu0 0.0
        %892 = vmatprep.subr.mxu0 0.0
        %893 = vmatpush1.msra.mxu0 0.0
        %894 = vmatprep.subr.mxu0 0.0
        %895 = vmatpush1.msra.mxu0 0.0
        %896 = vmatprep.subr.mxu0 0.0
        %897 = vmatpush1.msra.mxu0 0.0
        %898 = vmatprep.subr.mxu0 0.0
        %899 = vmatpush1.msra.mxu0 0.0
        %900 = vmatprep.subr.mxu0 0.0
        %901 = vmatpush1.msra.mxu0 0.0
        %902 = vmatprep.subr.mxu0 0.0
        %903 = vmatpush1.msra.mxu0 0.0
        %904 = vmatprep.subr.mxu0 0.0
        %905 = vmatpush1.msra.mxu0 0.0
        %906 = vmatprep.subr.mxu0 0.0
        %907 = vmatpush1.msra.mxu0 0.0
        %908 = vmatprep.subr.mxu0 0.0
        %909 = vmatpush1.msra.mxu0 0.0
        %910 = vmatprep.subr.mxu0 0.0
        %911 = vmatpush1.msra.mxu0 0.0
        %912 = vmatprep.subr.mxu0 0.0
        %913 = vmatpush1.msra.mxu0 0.0
        %914 = vmatprep.mubr.f32.mxu0 0.0
        %v915 = vand.u32 %v751, 4294901760
        %916 = vmatmul.mubr.f32.gmra.mrb[0].mxu0 %v915
        %v917 = vpop.f32.mrb[0].mxu0
        %v918 = vadd.f32 %v832, %v917
        %v919 = vpop.f32.mrb[0].mxu0
        %920 = vmatprep.mubr.f32.mxu0 0.0
        %v921 = vand.u32 %v754, 4294901760
        %922 = vmatmul.mubr.f32.gmra.mrb[0].mxu0 %v921
        %v923 = vpop.f32.mrb[0].mxu0
        %v924 = vadd.f32 %v842, %v923
        %v925 = vpop.f32.mrb[0].mxu0
        %926 = vdwg.mxu0
        %927 = vmatprep.subr.mxu0 0.0
        %v928 = vand.u32 %v757, 4294901760
        %v929 = vsub.f32 %v757, %v928
        %930 = vmatpush1.msra.mxu0 %v929
        %931 = vmatprep.subr.mxu0 0.0
        %932 = vmatpush1.msra.mxu0 0.0
        %933 = vmatprep.subr.mxu0 0.0
        %934 = vmatpush1.msra.mxu0 0.0
        %935 = vmatprep.subr.mxu0 0.0
        %936 = vmatpush1.msra.mxu0 0.0
        %937 = vmatprep.subr.mxu0 0.0
        %938 = vmatpush1.msra.mxu0 0.0
        %939 = vmatprep.subr.mxu0 0.0
        %940 = vmatpush1.msra.mxu0 0.0
        %941 = vmatprep.subr.mxu0 0.0
        %942 = vmatpush1.msra.mxu0 0.0
        %943 = vmatprep.subr.mxu0 0.0
        %944 = vmatpush1.msra.mxu0 0.0
        %945 = vmatprep.subr.mxu0 0.0
        %946 = vmatpush1.msra.mxu0 0.0
        %947 = vmatprep.subr.mxu0 0.0
        %948 = vmatpush1.msra.mxu0 0.0
        %949 = vmatprep.subr.mxu0 0.0
        %950 = vmatpush1.msra.mxu0 0.0
        %951 = vmatprep.subr.mxu0 0.0
        %952 = vmatpush1.msra.mxu0 0.0
        %953 = vmatprep.subr.mxu0 0.0
        %954 = vmatpush1.msra.mxu0 0.0
        %955 = vmatprep.subr.mxu0 0.0
        %956 = vmatpush1.msra.mxu0 0.0
        %957 = vmatprep.subr.mxu0 0.0
        %958 = vmatpush1.msra.mxu0 0.0
        %959 = vmatprep.subr.mxu0 0.0
        %960 = vmatpush1.msra.mxu0 0.0
        %961 = vmatprep.subr.mxu0 0.0
        %962 = vmatpush1.msra.mxu0 0.0
        %963 = vmatprep.subr.mxu0 0.0
        %964 = vmatpush1.msra.mxu0 0.0
        %965 = vmatprep.subr.mxu0 0.0
        %966 = vmatpush1.msra.mxu0 0.0
        %967 = vmatprep.subr.mxu0 0.0
        %968 = vmatpush1.msra.mxu0 0.0
        %969 = vmatprep.subr.mxu0 0.0
        %970 = vmatpush1.msra.mxu0 0.0
        %971 = vmatprep.subr.mxu0 0.0
        %972 = vmatpush1.msra.mxu0 0.0
        %973 = vmatprep.subr.mxu0 0.0
        %974 = vmatpush1.msra.mxu0 0.0
        %975 = vmatprep.subr.mxu0 0.0
        %976 = vmatpush1.msra.mxu0 0.0
        %977 = vmatprep.subr.mxu0 0.0
        %978 = vmatpush1.msra.mxu0 0.0
        %979 = vmatprep.subr.mxu0 0.0
        %980 = vmatpush1.msra.mxu0 0.0
        %981 = vmatprep.subr.mxu0 0.0
        %982 = vmatpush1.msra.mxu0 0.0
        %983 = vmatprep.subr.mxu0 0.0
        %984 = vmatpush1.msra.mxu0 0.0
        %985 = vmatprep.subr.mxu0 0.0
        %986 = vmatpush1.msra.mxu0 0.0
        %987 = vmatprep.subr.mxu0 0.0
        %988 = vmatpush1.msra.mxu0 0.0
        %989 = vmatprep.subr.mxu0 0.0
        %990 = vmatpush1.msra.mxu0 0.0
        %991 = vmatprep.subr.mxu0 0.0
        %992 = vmatpush1.msra.mxu0 0.0
        %993 = vmatprep.mubr.f32.mxu0 0.0
        %v994 = vand.u32 %v751, 4294901760
        %v995 = vsub.f32 %v751, %v994
        %996 = vmatmul.mubr.f32.gmra.mrb[0].mxu0 %v995
        %v997 = vpop.f32.mrb[0].mxu0
        %v998 = vadd.f32 %v918, %v997
        %v999 = vpop.f32.mrb[0].mxu0
        %1000 = vmatprep.mubr.f32.mxu0 0.0
        %v1001 = vand.u32 %v754, 4294901760
        %v1002 = vsub.f32 %v754, %v1001
        %1003 = vmatmul.mubr.f32.gmra.mrb[0].mxu0 %v1002
        %v1004 = vpop.f32.mrb[0].mxu0
        %v1005 = vadd.f32 %v924, %v1004
        %v1006 = vpop.f32.mrb[0].mxu0
        %1007 = vdwg.mxu0
        %1008 = vmatprep.subr.mxu0 0.0
        %v1009 = vand.u32 %v757, 4294901760
        %1010 = vmatpush1.msra.mxu0 %v1009
        %1011 = vmatprep.subr.mxu0 0.0
        %1012 = vmatpush1.msra.mxu0 0.0
        %1013 = vmatprep.subr.mxu0 0.0
        %1014 = vmatpush1.msra.mxu0 0.0
        %1015 = vmatprep.subr.mxu0 0.0
        %1016 = vmatpush1.msra.mxu0 0.0
        %1017 = vmatprep.subr.mxu0 0.0
        %1018 = vmatpush1.msra.mxu0 0.0
        %1019 = vmatprep.subr.mxu0 0.0
        %1020 = vmatpush1.msra.mxu0 0.0
        %1021 = vmatprep.subr.mxu0 0.0
        %1022 = vmatpush1.msra.mxu0 0.0
        %1023 = vmatprep.subr.mxu0 0.0
        %1024 = vmatpush1.msra.mxu0 0.0
        %1025 = vmatprep.subr.mxu0 0.0
        %1026 = vmatpush1.msra.mxu0 0.0
        %1027 = vmatprep.subr.mxu0 0.0
        %1028 = vmatpush1.msra.mxu0 0.0
        %1029 = vmatprep.subr.mxu0 0.0
        %1030 = vmatpush1.msra.mxu0 0.0
        %1031 = vmatprep.subr.mxu0 0.0
        %1032 = vmatpush1.msra.mxu0 0.0
        %1033 = vmatprep.subr.mxu0 0.0
        %1034 = vmatpush1.msra.mxu0 0.0
        %1035 = vmatprep.subr.mxu0 0.0
        %1036 = vmatpush1.msra.mxu0 0.0
        %1037 = vmatprep.subr.mxu0 0.0
        %1038 = vmatpush1.msra.mxu0 0.0
        %1039 = vmatprep.subr.mxu0 0.0
        %1040 = vmatpush1.msra.mxu0 0.0
        %1041 = vmatprep.subr.mxu0 0.0
        %1042 = vmatpush1.msra.mxu0 0.0
        %1043 = vmatprep.subr.mxu0 0.0
        %1044 = vmatpush1.msra.mxu0 0.0
        %1045 = vmatprep.subr.mxu0 0.0
        %1046 = vmatpush1.msra.mxu0 0.0
        %1047 = vmatprep.subr.mxu0 0.0
        %1048 = vmatpush1.msra.mxu0 0.0
        %1049 = vmatprep.subr.mxu0 0.0
        %1050 = vmatpush1.msra.mxu0 0.0
        %1051 = vmatprep.subr.mxu0 0.0
        %1052 = vmatpush1.msra.mxu0 0.0
        %1053 = vmatprep.subr.mxu0 0.0
        %1054 = vmatpush1.msra.mxu0 0.0
        %1055 = vmatprep.subr.mxu0 0.0
        %1056 = vmatpush1.msra.mxu0 0.0
        %1057 = vmatprep.subr.mxu0 0.0
        %1058 = vmatpush1.msra.mxu0 0.0
        %1059 = vmatprep.subr.mxu0 0.0
        %1060 = vmatpush1.msra.mxu0 0.0
        %1061 = vmatprep.subr.mxu0 0.0
        %1062 = vmatpush1.msra.mxu0 0.0
        %1063 = vmatprep.subr.mxu0 0.0
        %1064 = vmatpush1.msra.mxu0 0.0
        %1065 = vmatprep.subr.mxu0 0.0
        %1066 = vmatpush1.msra.mxu0 0.0
        %1067 = vmatprep.subr.mxu0 0.0
        %1068 = vmatpush1.msra.mxu0 0.0
        %1069 = vmatprep.subr.mxu0 0.0
        %1070 = vmatpush1.msra.mxu0 0.0
        %1071 = vmatprep.subr.mxu0 0.0
        %1072 = vmatpush1.msra.mxu0 0.0
        %1073 = vmatprep.mubr.f32.mxu0 0.0
        %v1074 = vand.u32 %v751, 4294901760
        %v1075 = vsub.f32 %v751, %v1074
        %v1076 = vand.u32 %v1075, 4294901760
        %1077 = vmatmul.mubr.f32.gmra.mrb[0].mxu0 %v1076
        %v1078 = vpop.f32.mrb[0].mxu0
        %v1079 = vadd.f32 %v998, %v1078
        %v1080 = vpop.f32.mrb[0].mxu0
        %1081 = vmatprep.mubr.f32.mxu0 0.0
        %v1082 = vand.u32 %v754, 4294901760
        %v1083 = vsub.f32 %v754, %v1082
        %v1084 = vand.u32 %v1083, 4294901760
        %1085 = vmatmul.mubr.f32.gmra.mrb[0].mxu0 %v1084
        %v1086 = vpop.f32.mrb[0].mxu0
        %v1087 = vadd.f32 %v1005, %v1086
        %v1088 = vpop.f32.mrb[0].mxu0
        %1089 = vdwg.mxu0
        %1090 = vmatprep.subr.mxu0 0.0
        %v1091 = vand.u32 %v757, 4294901760
        %v1092 = vsub.f32 %v757, %v1091
        %v1093 = vand.u32 %v1092, 4294901760
        %1094 = vmatpush1.msra.mxu0 %v1093
        %1095 = vmatprep.subr.mxu0 0.0
        %1096 = vmatpush1.msra.mxu0 0.0
        %1097 = vmatprep.subr.mxu0 0.0
        %1098 = vmatpush1.msra.mxu0 0.0
        %1099 = vmatprep.subr.mxu0 0.0
        %1100 = vmatpush1.msra.mxu0 0.0
        %1101 = vmatprep.subr.mxu0 0.0
        %1102 = vmatpush1.msra.mxu0 0.0
        %1103 = vmatprep.subr.mxu0 0.0
        %1104 = vmatpush1.msra.mxu0 0.0
        %1105 = vmatprep.subr.mxu0 0.0
        %1106 = vmatpush1.msra.mxu0 0.0
        %1107 = vmatprep.subr.mxu0 0.0
        %1108 = vmatpush1.msra.mxu0 0.0
        %1109 = vmatprep.subr.mxu0 0.0
        %1110 = vmatpush1.msra.mxu0 0.0
        %1111 = vmatprep.subr.mxu0 0.0
        %1112 = vmatpush1.msra.mxu0 0.0
        %1113 = vmatprep.subr.mxu0 0.0
        %1114 = vmatpush1.msra.mxu0 0.0
        %1115 = vmatprep.subr.mxu0 0.0
        %1116 = vmatpush1.msra.mxu0 0.0
        %1117 = vmatprep.subr.mxu0 0.0
        %1118 = vmatpush1.msra.mxu0 0.0
        %1119 = vmatprep.subr.mxu0 0.0
        %1120 = vmatpush1.msra.mxu0 0.0
        %1121 = vmatprep.subr.mxu0 0.0
        %1122 = vmatpush1.msra.mxu0 0.0
        %1123 = vmatprep.subr.mxu0 0.0
        %1124 = vmatpush1.msra.mxu0 0.0
        %1125 = vmatprep.subr.mxu0 0.0
        %1126 = vmatpush1.msra.mxu0 0.0
        %1127 = vmatprep.subr.mxu0 0.0
        %1128 = vmatpush1.msra.mxu0 0.0
        %1129 = vmatprep.subr.mxu0 0.0
        %1130 = vmatpush1.msra.mxu0 0.0
        %1131 = vmatprep.subr.mxu0 0.0
        %1132 = vmatpush1.msra.mxu0 0.0
        %1133 = vmatprep.subr.mxu0 0.0
        %1134 = vmatpush1.msra.mxu0 0.0
        %1135 = vmatprep.subr.mxu0 0.0
        %1136 = vmatpush1.msra.mxu0 0.0
        %1137 = vmatprep.subr.mxu0 0.0
        %1138 = vmatpush1.msra.mxu0 0.0
        %1139 = vmatprep.subr.mxu0 0.0
        %1140 = vmatpush1.msra.mxu0 0.0
        %1141 = vmatprep.subr.mxu0 0.0
        %1142 = vmatpush1.msra.mxu0 0.0
        %1143 = vmatprep.subr.mxu0 0.0
        %1144 = vmatpush1.msra.mxu0 0.0
        %1145 = vmatprep.subr.mxu0 0.0
        %1146 = vmatpush1.msra.mxu0 0.0
        %1147 = vmatprep.subr.mxu0 0.0
        %1148 = vmatpush1.msra.mxu0 0.0
        %1149 = vmatprep.subr.mxu0 0.0
        %1150 = vmatpush1.msra.mxu0 0.0
        %1151 = vmatprep.subr.mxu0 0.0
        %1152 = vmatpush1.msra.mxu0 0.0
        %1153 = vmatprep.subr.mxu0 0.0
        %1154 = vmatpush1.msra.mxu0 0.0
        %1155 = vmatprep.subr.mxu0 0.0
        %1156 = vmatpush1.msra.mxu0 0.0
        %1157 = vmatprep.mubr.f32.mxu0 0.0
        %v1158 = vand.u32 %v751, 4294901760
        %1159 = vmatmul.mubr.f32.gmra.mrb[0].mxu0 %v1158
        %v1160 = vpop.f32.mrb[0].mxu0
        %v1161 = vadd.f32 %v1079, %v1160
        %v1162 = vpop.f32.mrb[0].mxu0
        %1163 = vmatprep.mubr.f32.mxu0 0.0
        %v1164 = vand.u32 %v754, 4294901760
        %1165 = vmatmul.mubr.f32.gmra.mrb[0].mxu0 %v1164
        %v1166 = vpop.f32.mrb[0].mxu0
        %v1167 = vadd.f32 %v1087, %v1166
        %v1168 = vpop.f32.mrb[0].mxu0
        %1169 = vdwg.mxu0
        %1170 = vmatprep.subr.mxu0 0.0
        %v1171 = vand.u32 %v757, 4294901760
        %1172 = vmatpush1.msra.mxu0 %v1171
        %1173 = vmatprep.subr.mxu0 0.0
        %1174 = vmatpush1.msra.mxu0 0.0
        %1175 = vmatprep.subr.mxu0 0.0
        %1176 = vmatpush1.msra.mxu0 0.0
        %1177 = vmatprep.subr.mxu0 0.0
        %1178 = vmatpush1.msra.mxu0 0.0
        %1179 = vmatprep.subr.mxu0 0.0
        %1180 = vmatpush1.msra.mxu0 0.0
        %1181 = vmatprep.subr.mxu0 0.0
        %1182 = vmatpush1.msra.mxu0 0.0
        %1183 = vmatprep.subr.mxu0 0.0
        %1184 = vmatpush1.msra.mxu0 0.0
        %1185 = vmatprep.subr.mxu0 0.0
        %1186 = vmatpush1.msra.mxu0 0.0
        %1187 = vmatprep.subr.mxu0 0.0
        %1188 = vmatpush1.msra.mxu0 0.0
        %1189 = vmatprep.subr.mxu0 0.0
        %1190 = vmatpush1.msra.mxu0 0.0
        %1191 = vmatprep.subr.mxu0 0.0
        %1192 = vmatpush1.msra.mxu0 0.0
        %1193 = vmatprep.subr.mxu0 0.0
        %1194 = vmatpush1.msra.mxu0 0.0
        %1195 = vmatprep.subr.mxu0 0.0
        %1196 = vmatpush1.msra.mxu0 0.0
        %1197 = vmatprep.subr.mxu0 0.0
        %1198 = vmatpush1.msra.mxu0 0.0
        %1199 = vmatprep.subr.mxu0 0.0
        %1200 = vmatpush1.msra.mxu0 0.0
        %1201 = vmatprep.subr.mxu0 0.0
        %1202 = vmatpush1.msra.mxu0 0.0
        %1203 = vmatprep.subr.mxu0 0.0
        %1204 = vmatpush1.msra.mxu0 0.0
        %1205 = vmatprep.subr.mxu0 0.0
        %1206 = vmatpush1.msra.mxu0 0.0
        %1207 = vmatprep.subr.mxu0 0.0
        %1208 = vmatpush1.msra.mxu0 0.0
        %1209 = vmatprep.subr.mxu0 0.0
        %1210 = vmatpush1.msra.mxu0 0.0
        %1211 = vmatprep.subr.mxu0 0.0
        %1212 = vmatpush1.msra.mxu0 0.0
        %1213 = vmatprep.subr.mxu0 0.0
        %1214 = vmatpush1.msra.mxu0 0.0
        %1215 = vmatprep.subr.mxu0 0.0
        %1216 = vmatpush1.msra.mxu0 0.0
        %1217 = vmatprep.subr.mxu0 0.0
        %1218 = vmatpush1.msra.mxu0 0.0
        %1219 = vmatprep.subr.mxu0 0.0
        %1220 = vmatpush1.msra.mxu0 0.0
        %1221 = vmatprep.subr.mxu0 0.0
        %1222 = vmatpush1.msra.mxu0 0.0
        %1223 = vmatprep.subr.mxu0 0.0
        %1224 = vmatpush1.msra.mxu0 0.0
        %1225 = vmatprep.subr.mxu0 0.0
        %1226 = vmatpush1.msra.mxu0 0.0
        %1227 = vmatprep.subr.mxu0 0.0
        %1228 = vmatpush1.msra.mxu0 0.0
        %1229 = vmatprep.subr.mxu0 0.0
        %1230 = vmatpush1.msra.mxu0 0.0
        %1231 = vmatprep.subr.mxu0 0.0
        %1232 = vmatpush1.msra.mxu0 0.0
        %1233 = vmatprep.subr.mxu0 0.0
        %1234 = vmatpush1.msra.mxu0 0.0
        %1235 = vmatprep.mubr.f32.mxu0 0.0
        %v1236 = vand.u32 %v751, 4294901760
        %1237 = vmatmul.mubr.f32.gmra.mrb[0].mxu0 %v1236
        %v1238 = vpop.f32.mrb[0].mxu0
        %v1239 = vadd.f32 %v1161, %v1238
        %v1240 = vpop.f32.mrb[0].mxu0
        %1241 = vmatprep.mubr.f32.mxu0 0.0
        %v1242 = vand.u32 %v754, 4294901760
        %1243 = vmatmul.mubr.f32.gmra.mrb[0].mxu0 %v1242
        %v1244 = vpop.f32.mrb[0].mxu0
        %v1245 = vadd.f32 %v1167, %v1244
        %v1246 = vpop.f32.mrb[0].mxu0
        %1247 = vdwg.mxu0
        %v1248 = vadd.f32 %v747, %v1239
        %v1249 = vadd.f32 %v748, %v1245
        %v1250 = vrot.slane %v223, 1
        %v1251 = vrot.slane %v224, 1
        %vm1252 = vcmp.lt.s32.totalorder %v226, 7
        %v1253 = vsel %vm1252, %v1250, %v1251
        %v1254 = vsel %vm1252, %v1251, %v1250
        %vm1255 = vcmp.lt.s32.totalorder %v228, 15
        %vm1256 = vcmp.lt.s32.totalorder %v229, 15
        %v1257 = vsel %vm1255, %v1253, 0.0
        %v1258 = vsel %vm1256, %v1254, 0.0
        %v1259 = vld [vmem:[%s1 + $0x8] sm:$0xf]
        %v1261 = vsel %vm241, %v1257, 0
        %v1264 = vsel %vm241, %v1258, 0
        %v1267 = vsel %vm248, %v1259, 0
        %1269 = vmatprep.subr.mxu0 0.0
        %v1270 = vand.u32 %v1267, 4294901760
        %1271 = vmatpush1.msra.mxu0 %v1270
        %1272 = vmatprep.subr.mxu0 0.0
        %1273 = vmatpush1.msra.mxu0 0.0
        %1274 = vmatprep.subr.mxu0 0.0
        %1275 = vmatpush1.msra.mxu0 0.0
        %1276 = vmatprep.subr.mxu0 0.0
        %1277 = vmatpush1.msra.mxu0 0.0
        %1278 = vmatprep.subr.mxu0 0.0
        %1279 = vmatpush1.msra.mxu0 0.0
        %1280 = vmatprep.subr.mxu0 0.0
        %1281 = vmatpush1.msra.mxu0 0.0
        %1282 = vmatprep.subr.mxu0 0.0
        %1283 = vmatpush1.msra.mxu0 0.0
        %1284 = vmatprep.subr.mxu0 0.0
        %1285 = vmatpush1.msra.mxu0 0.0
        %1286 = vmatprep.subr.mxu0 0.0
        %1287 = vmatpush1.msra.mxu0 0.0
        %1288 = vmatprep.subr.mxu0 0.0
        %1289 = vmatpush1.msra.mxu0 0.0
        %1290 = vmatprep.subr.mxu0 0.0
        %1291 = vmatpush1.msra.mxu0 0.0
        %1292 = vmatprep.subr.mxu0 0.0
        %1293 = vmatpush1.msra.mxu0 0.0
        %1294 = vmatprep.subr.mxu0 0.0
        %1295 = vmatpush1.msra.mxu0 0.0
        %1296 = vmatprep.subr.mxu0 0.0
        %1297 = vmatpush1.msra.mxu0 0.0
        %1298 = vmatprep.subr.mxu0 0.0
        %1299 = vmatpush1.msra.mxu0 0.0
        %1300 = vmatprep.subr.mxu0 0.0
        %1301 = vmatpush1.msra.mxu0 0.0
        %1302 = vmatprep.subr.mxu0 0.0
        %1303 = vmatpush1.msra.mxu0 0.0
        %1304 = vmatprep.subr.mxu0 0.0
        %1305 = vmatpush1.msra.mxu0 0.0
        %1306 = vmatprep.subr.mxu0 0.0
        %1307 = vmatpush1.msra.mxu0 0.0
        %1308 = vmatprep.subr.mxu0 0.0
        %1309 = vmatpush1.msra.mxu0 0.0
        %1310 = vmatprep.subr.mxu0 0.0
        %1311 = vmatpush1.msra.mxu0 0.0
        %1312 = vmatprep.subr.mxu0 0.0
        %1313 = vmatpush1.msra.mxu0 0.0
        %1314 = vmatprep.subr.mxu0 0.0
        %1315 = vmatpush1.msra.mxu0 0.0
        %1316 = vmatprep.subr.mxu0 0.0
        %1317 = vmatpush1.msra.mxu0 0.0
        %1318 = vmatprep.subr.mxu0 0.0
        %1319 = vmatpush1.msra.mxu0 0.0
        %1320 = vmatprep.subr.mxu0 0.0
        %1321 = vmatpush1.msra.mxu0 0.0
        %1322 = vmatprep.subr.mxu0 0.0
        %1323 = vmatpush1.msra.mxu0 0.0
        %1324 = vmatprep.subr.mxu0 0.0
        %1325 = vmatpush1.msra.mxu0 0.0
        %1326 = vmatprep.subr.mxu0 0.0
        %1327 = vmatpush1.msra.mxu0 0.0
        %1328 = vmatprep.subr.mxu0 0.0
        %1329 = vmatpush1.msra.mxu0 0.0
        %1330 = vmatprep.subr.mxu0 0.0
        %1331 = vmatpush1.msra.mxu0 0.0
        %1332 = vmatprep.subr.mxu0 0.0
        %1333 = vmatpush1.msra.mxu0 0.0
        %1334 = vmatprep.mubr.f32.mxu0 0.0
        %v1335 = vand.u32 %v1261, 4294901760
        %v1336 = vsub.f32 %v1261, %v1335
        %v1337 = vand.u32 %v1336, 4294901760
        %v1338 = vsub.f32 %v1336, %v1337
        %v1339 = vand.u32 %v1338, 4294901760
        %1340 = vmatmul.mubr.f32.gmra.mrb[0].mxu0 %v1339
        %v1341 = vpop.f32.mrb[0].mxu0
        %v1342 = vadd.f32 0.0, %v1341
        %v1343 = vpop.f32.mrb[0].mxu0
        %1344 = vmatprep.mubr.f32.mxu0 0.0
        %v1345 = vand.u32 %v1264, 4294901760
        %v1346 = vsub.f32 %v1264, %v1345
        %v1347 = vand.u32 %v1346, 4294901760
        %v1348 = vsub.f32 %v1346, %v1347
        %v1349 = vand.u32 %v1348, 4294901760
        %1350 = vmatmul.mubr.f32.gmra.mrb[0].mxu0 %v1349
        %v1351 = vpop.f32.mrb[0].mxu0
        %v1352 = vadd.f32 0.0, %v1351
        %v1353 = vpop.f32.mrb[0].mxu0
        %1354 = vdwg.mxu0
        %1355 = vmatprep.subr.mxu0 0.0
        %v1356 = vand.u32 %v1267, 4294901760
        %v1357 = vsub.f32 %v1267, %v1356
        %v1358 = vand.u32 %v1357, 4294901760
        %v1359 = vsub.f32 %v1357, %v1358
        %v1360 = vand.u32 %v1359, 4294901760
        %1361 = vmatpush1.msra.mxu0 %v1360
        %1362 = vmatprep.subr.mxu0 0.0
        %1363 = vmatpush1.msra.mxu0 0.0
        %1364 = vmatprep.subr.mxu0 0.0
        %1365 = vmatpush1.msra.mxu0 0.0
        %1366 = vmatprep.subr.mxu0 0.0
        %1367 = vmatpush1.msra.mxu0 0.0
        %1368 = vmatprep.subr.mxu0 0.0
        %1369 = vmatpush1.msra.mxu0 0.0
        %1370 = vmatprep.subr.mxu0 0.0
        %1371 = vmatpush1.msra.mxu0 0.0
        %1372 = vmatprep.subr.mxu0 0.0
        %1373 = vmatpush1.msra.mxu0 0.0
        %1374 = vmatprep.subr.mxu0 0.0
        %1375 = vmatpush1.msra.mxu0 0.0
        %1376 = vmatprep.subr.mxu0 0.0
        %1377 = vmatpush1.msra.mxu0 0.0
        %1378 = vmatprep.subr.mxu0 0.0
        %1379 = vmatpush1.msra.mxu0 0.0
        %1380 = vmatprep.subr.mxu0 0.0
        %1381 = vmatpush1.msra.mxu0 0.0
        %1382 = vmatprep.subr.mxu0 0.0
        %1383 = vmatpush1.msra.mxu0 0.0
        %1384 = vmatprep.subr.mxu0 0.0
        %1385 = vmatpush1.msra.mxu0 0.0
        %1386 = vmatprep.subr.mxu0 0.0
        %1387 = vmatpush1.msra.mxu0 0.0
        %1388 = vmatprep.subr.mxu0 0.0
        %1389 = vmatpush1.msra.mxu0 0.0
        %1390 = vmatprep.subr.mxu0 0.0
        %1391 = vmatpush1.msra.mxu0 0.0
        %1392 = vmatprep.subr.mxu0 0.0
        %1393 = vmatpush1.msra.mxu0 0.0
        %1394 = vmatprep.subr.mxu0 0.0
        %1395 = vmatpush1.msra.mxu0 0.0
        %1396 = vmatprep.subr.mxu0 0.0
        %1397 = vmatpush1.msra.mxu0 0.0
        %1398 = vmatprep.subr.mxu0 0.0
        %1399 = vmatpush1.msra.mxu0 0.0
        %1400 = vmatprep.subr.mxu0 0.0
        %1401 = vmatpush1.msra.mxu0 0.0
        %1402 = vmatprep.subr.mxu0 0.0
        %1403 = vmatpush1.msra.mxu0 0.0
        %1404 = vmatprep.subr.mxu0 0.0
        %1405 = vmatpush1.msra.mxu0 0.0
        %1406 = vmatprep.subr.mxu0 0.0
        %1407 = vmatpush1.msra.mxu0 0.0
        %1408 = vmatprep.subr.mxu0 0.0
        %1409 = vmatpush1.msra.mxu0 0.0
        %1410 = vmatprep.subr.mxu0 0.0
        %1411 = vmatpush1.msra.mxu0 0.0
        %1412 = vmatprep.subr.mxu0 0.0
        %1413 = vmatpush1.msra.mxu0 0.0
        %1414 = vmatprep.subr.mxu0 0.0
        %1415 = vmatpush1.msra.mxu0 0.0
        %1416 = vmatprep.subr.mxu0 0.0
        %1417 = vmatpush1.msra.mxu0 0.0
        %1418 = vmatprep.subr.mxu0 0.0
        %1419 = vmatpush1.msra.mxu0 0.0
        %1420 = vmatprep.subr.mxu0 0.0
        %1421 = vmatpush1.msra.mxu0 0.0
        %1422 = vmatprep.subr.mxu0 0.0
        %1423 = vmatpush1.msra.mxu0 0.0
        %1424 = vmatprep.mubr.f32.mxu0 0.0
        %v1425 = vand.u32 %v1261, 4294901760
        %1426 = vmatmul.mubr.f32.gmra.mrb[0].mxu0 %v1425
        %v1427 = vpop.f32.mrb[0].mxu0
        %v1428 = vadd.f32 %v1342, %v1427
        %v1429 = vpop.f32.mrb[0].mxu0
        %1430 = vmatprep.mubr.f32.mxu0 0.0
        %v1431 = vand.u32 %v1264, 4294901760
        %1432 = vmatmul.mubr.f32.gmra.mrb[0].mxu0 %v1431
        %v1433 = vpop.f32.mrb[0].mxu0
        %v1434 = vadd.f32 %v1352, %v1433
        %v1435 = vpop.f32.mrb[0].mxu0
        %1436 = vdwg.mxu0
        %1437 = vmatprep.subr.mxu0 0.0
        %v1438 = vand.u32 %v1267, 4294901760
        %v1439 = vsub.f32 %v1267, %v1438
        %1440 = vmatpush1.msra.mxu0 %v1439
        %1441 = vmatprep.subr.mxu0 0.0
        %1442 = vmatpush1.msra.mxu0 0.0
        %1443 = vmatprep.subr.mxu0 0.0
        %1444 = vmatpush1.msra.mxu0 0.0
        %1445 = vmatprep.subr.mxu0 0.0
        %1446 = vmatpush1.msra.mxu0 0.0
        %1447 = vmatprep.subr.mxu0 0.0
        %1448 = vmatpush1.msra.mxu0 0.0
        %1449 = vmatprep.subr.mxu0 0.0
        %1450 = vmatpush1.msra.mxu0 0.0
        %1451 = vmatprep.subr.mxu0 0.0
        %1452 = vmatpush1.msra.mxu0 0.0
        %1453 = vmatprep.subr.mxu0 0.0
        %1454 = vmatpush1.msra.mxu0 0.0
        %1455 = vmatprep.subr.mxu0 0.0
        %1456 = vmatpush1.msra.mxu0 0.0
        %1457 = vmatprep.subr.mxu0 0.0
        %1458 = vmatpush1.msra.mxu0 0.0
        %1459 = vmatprep.subr.mxu0 0.0
        %1460 = vmatpush1.msra.mxu0 0.0
        %1461 = vmatprep.subr.mxu0 0.0
        %1462 = vmatpush1.msra.mxu0 0.0
        %1463 = vmatprep.subr.mxu0 0.0
        %1464 = vmatpush1.msra.mxu0 0.0
        %1465 = vmatprep.subr.mxu0 0.0
        %1466 = vmatpush1.msra.mxu0 0.0
        %1467 = vmatprep.subr.mxu0 0.0
        %1468 = vmatpush1.msra.mxu0 0.0
        %1469 = vmatprep.subr.mxu0 0.0
        %1470 = vmatpush1.msra.mxu0 0.0
        %1471 = vmatprep.subr.mxu0 0.0
        %1472 = vmatpush1.msra.mxu0 0.0
        %1473 = vmatprep.subr.mxu0 0.0
        %1474 = vmatpush1.msra.mxu0 0.0
        %1475 = vmatprep.subr.mxu0 0.0
        %1476 = vmatpush1.msra.mxu0 0.0
        %1477 = vmatprep.subr.mxu0 0.0
        %1478 = vmatpush1.msra.mxu0 0.0
        %1479 = vmatprep.subr.mxu0 0.0
        %1480 = vmatpush1.msra.mxu0 0.0
        %1481 = vmatprep.subr.mxu0 0.0
        %1482 = vmatpush1.msra.mxu0 0.0
        %1483 = vmatprep.subr.mxu0 0.0
        %1484 = vmatpush1.msra.mxu0 0.0
        %1485 = vmatprep.subr.mxu0 0.0
        %1486 = vmatpush1.msra.mxu0 0.0
        %1487 = vmatprep.subr.mxu0 0.0
        %1488 = vmatpush1.msra.mxu0 0.0
        %1489 = vmatprep.subr.mxu0 0.0
        %1490 = vmatpush1.msra.mxu0 0.0
        %1491 = vmatprep.subr.mxu0 0.0
        %1492 = vmatpush1.msra.mxu0 0.0
        %1493 = vmatprep.subr.mxu0 0.0
        %1494 = vmatpush1.msra.mxu0 0.0
        %1495 = vmatprep.subr.mxu0 0.0
        %1496 = vmatpush1.msra.mxu0 0.0
        %1497 = vmatprep.subr.mxu0 0.0
        %1498 = vmatpush1.msra.mxu0 0.0
        %1499 = vmatprep.subr.mxu0 0.0
        %1500 = vmatpush1.msra.mxu0 0.0
        %1501 = vmatprep.subr.mxu0 0.0
        %1502 = vmatpush1.msra.mxu0 0.0
        %1503 = vmatprep.mubr.f32.mxu0 0.0
        %v1504 = vand.u32 %v1261, 4294901760
        %v1505 = vsub.f32 %v1261, %v1504
        %1506 = vmatmul.mubr.f32.gmra.mrb[0].mxu0 %v1505
        %v1507 = vpop.f32.mrb[0].mxu0
        %v1508 = vadd.f32 %v1428, %v1507
        %v1509 = vpop.f32.mrb[0].mxu0
        %1510 = vmatprep.mubr.f32.mxu0 0.0
        %v1511 = vand.u32 %v1264, 4294901760
        %v1512 = vsub.f32 %v1264, %v1511
        %1513 = vmatmul.mubr.f32.gmra.mrb[0].mxu0 %v1512
        %v1514 = vpop.f32.mrb[0].mxu0
        %v1515 = vadd.f32 %v1434, %v1514
        %v1516 = vpop.f32.mrb[0].mxu0
        %1517 = vdwg.mxu0
        %1518 = vmatprep.subr.mxu0 0.0
        %v1519 = vand.u32 %v1267, 4294901760
        %1520 = vmatpush1.msra.mxu0 %v1519
        %1521 = vmatprep.subr.mxu0 0.0
        %1522 = vmatpush1.msra.mxu0 0.0
        %1523 = vmatprep.subr.mxu0 0.0
        %1524 = vmatpush1.msra.mxu0 0.0
        %1525 = vmatprep.subr.mxu0 0.0
        %1526 = vmatpush1.msra.mxu0 0.0
        %1527 = vmatprep.subr.mxu0 0.0
        %1528 = vmatpush1.msra.mxu0 0.0
        %1529 = vmatprep.subr.mxu0 0.0
        %1530 = vmatpush1.msra.mxu0 0.0
        %1531 = vmatprep.subr.mxu0 0.0
        %1532 = vmatpush1.msra.mxu0 0.0
        %1533 = vmatprep.subr.mxu0 0.0
        %1534 = vmatpush1.msra.mxu0 0.0
        %1535 = vmatprep.subr.mxu0 0.0
        %1536 = vmatpush1.msra.mxu0 0.0
        %1537 = vmatprep.subr.mxu0 0.0
        %1538 = vmatpush1.msra.mxu0 0.0
        %1539 = vmatprep.subr.mxu0 0.0
        %1540 = vmatpush1.msra.mxu0 0.0
        %1541 = vmatprep.subr.mxu0 0.0
        %1542 = vmatpush1.msra.mxu0 0.0
        %1543 = vmatprep.subr.mxu0 0.0
        %1544 = vmatpush1.msra.mxu0 0.0
        %1545 = vmatprep.subr.mxu0 0.0
        %1546 = vmatpush1.msra.mxu0 0.0
        %1547 = vmatprep.subr.mxu0 0.0
        %1548 = vmatpush1.msra.mxu0 0.0
        %1549 = vmatprep.subr.mxu0 0.0
        %1550 = vmatpush1.msra.mxu0 0.0
        %1551 = vmatprep.subr.mxu0 0.0
        %1552 = vmatpush1.msra.mxu0 0.0
        %1553 = vmatprep.subr.mxu0 0.0
        %1554 = vmatpush1.msra.mxu0 0.0
        %1555 = vmatprep.subr.mxu0 0.0
        %1556 = vmatpush1.msra.mxu0 0.0
        %1557 = vmatprep.subr.mxu0 0.0
        %1558 = vmatpush1.msra.mxu0 0.0
        %1559 = vmatprep.subr.mxu0 0.0
        %1560 = vmatpush1.msra.mxu0 0.0
        %1561 = vmatprep.subr.mxu0 0.0
        %1562 = vmatpush1.msra.mxu0 0.0
        %1563 = vmatprep.subr.mxu0 0.0
        %1564 = vmatpush1.msra.mxu0 0.0
        %1565 = vmatprep.subr.mxu0 0.0
        %1566 = vmatpush1.msra.mxu0 0.0
        %1567 = vmatprep.subr.mxu0 0.0
        %1568 = vmatpush1.msra.mxu0 0.0
        %1569 = vmatprep.subr.mxu0 0.0
        %1570 = vmatpush1.msra.mxu0 0.0
        %1571 = vmatprep.subr.mxu0 0.0
        %1572 = vmatpush1.msra.mxu0 0.0
        %1573 = vmatprep.subr.mxu0 0.0
        %1574 = vmatpush1.msra.mxu0 0.0
        %1575 = vmatprep.subr.mxu0 0.0
        %1576 = vmatpush1.msra.mxu0 0.0
        %1577 = vmatprep.subr.mxu0 0.0
        %1578 = vmatpush1.msra.mxu0 0.0
        %1579 = vmatprep.subr.mxu0 0.0
        %1580 = vmatpush1.msra.mxu0 0.0
        %1581 = vmatprep.subr.mxu0 0.0
        %1582 = vmatpush1.msra.mxu0 0.0
        %1583 = vmatprep.mubr.f32.mxu0 0.0
        %v1584 = vand.u32 %v1261, 4294901760
        %v1585 = vsub.f32 %v1261, %v1584
        %v1586 = vand.u32 %v1585, 4294901760
        %1587 = vmatmul.mubr.f32.gmra.mrb[0].mxu0 %v1586
        %v1588 = vpop.f32.mrb[0].mxu0
        %v1589 = vadd.f32 %v1508, %v1588
        %v1590 = vpop.f32.mrb[0].mxu0
        %1591 = vmatprep.mubr.f32.mxu0 0.0
        %v1592 = vand.u32 %v1264, 4294901760
        %v1593 = vsub.f32 %v1264, %v1592
        %v1594 = vand.u32 %v1593, 4294901760
        %1595 = vmatmul.mubr.f32.gmra.mrb[0].mxu0 %v1594
        %v1596 = vpop.f32.mrb[0].mxu0
        %v1597 = vadd.f32 %v1515, %v1596
        %v1598 = vpop.f32.mrb[0].mxu0
        %1599 = vdwg.mxu0
        %1600 = vmatprep.subr.mxu0 0.0
        %v1601 = vand.u32 %v1267, 4294901760
        %v1602 = vsub.f32 %v1267, %v1601
        %v1603 = vand.u32 %v1602, 4294901760
        %1604 = vmatpush1.msra.mxu0 %v1603
        %1605 = vmatprep.subr.mxu0 0.0
        %1606 = vmatpush1.msra.mxu0 0.0
        %1607 = vmatprep.subr.mxu0 0.0
        %1608 = vmatpush1.msra.mxu0 0.0
        %1609 = vmatprep.subr.mxu0 0.0
        %1610 = vmatpush1.msra.mxu0 0.0
        %1611 = vmatprep.subr.mxu0 0.0
        %1612 = vmatpush1.msra.mxu0 0.0
        %1613 = vmatprep.subr.mxu0 0.0
        %1614 = vmatpush1.msra.mxu0 0.0
        %1615 = vmatprep.subr.mxu0 0.0
        %1616 = vmatpush1.msra.mxu0 0.0
        %1617 = vmatprep.subr.mxu0 0.0
        %1618 = vmatpush1.msra.mxu0 0.0
        %1619 = vmatprep.subr.mxu0 0.0
        %1620 = vmatpush1.msra.mxu0 0.0
        %1621 = vmatprep.subr.mxu0 0.0
        %1622 = vmatpush1.msra.mxu0 0.0
        %1623 = vmatprep.subr.mxu0 0.0
        %1624 = vmatpush1.msra.mxu0 0.0
        %1625 = vmatprep.subr.mxu0 0.0
        %1626 = vmatpush1.msra.mxu0 0.0
        %1627 = vmatprep.subr.mxu0 0.0
        %1628 = vmatpush1.msra.mxu0 0.0
        %1629 = vmatprep.subr.mxu0 0.0
        %1630 = vmatpush1.msra.mxu0 0.0
        %1631 = vmatprep.subr.mxu0 0.0
        %1632 = vmatpush1.msra.mxu0 0.0
        %1633 = vmatprep.subr.mxu0 0.0
        %1634 = vmatpush1.msra.mxu0 0.0
        %1635 = vmatprep.subr.mxu0 0.0
        %1636 = vmatpush1.msra.mxu0 0.0
        %1637 = vmatprep.subr.mxu0 0.0
        %1638 = vmatpush1.msra.mxu0 0.0
        %1639 = vmatprep.subr.mxu0 0.0
        %1640 = vmatpush1.msra.mxu0 0.0
        %1641 = vmatprep.subr.mxu0 0.0
        %1642 = vmatpush1.msra.mxu0 0.0
        %1643 = vmatprep.subr.mxu0 0.0
        %1644 = vmatpush1.msra.mxu0 0.0
        %1645 = vmatprep.subr.mxu0 0.0
        %1646 = vmatpush1.msra.mxu0 0.0
        %1647 = vmatprep.subr.mxu0 0.0
        %1648 = vmatpush1.msra.mxu0 0.0
        %1649 = vmatprep.subr.mxu0 0.0
        %1650 = vmatpush1.msra.mxu0 0.0
        %1651 = vmatprep.subr.mxu0 0.0
        %1652 = vmatpush1.msra.mxu0 0.0
        %1653 = vmatprep.subr.mxu0 0.0
        %1654 = vmatpush1.msra.mxu0 0.0
        %1655 = vmatprep.subr.mxu0 0.0
        %1656 = vmatpush1.msra.mxu0 0.0
        %1657 = vmatprep.subr.mxu0 0.0
        %1658 = vmatpush1.msra.mxu0 0.0
        %1659 = vmatprep.subr.mxu0 0.0
        %1660 = vmatpush1.msra.mxu0 0.0
        %1661 = vmatprep.subr.mxu0 0.0
        %1662 = vmatpush1.msra.mxu0 0.0
        %1663 = vmatprep.subr.mxu0 0.0
        %1664 = vmatpush1.msra.mxu0 0.0
        %1665 = vmatprep.subr.mxu0 0.0
        %1666 = vmatpush1.msra.mxu0 0.0
        %1667 = vmatprep.mubr.f32.mxu0 0.0
        %v1668 = vand.u32 %v1261, 4294901760
        %1669 = vmatmul.mubr.f32.gmra.mrb[0].mxu0 %v1668
        %v1670 = vpop.f32.mrb[0].mxu0
        %v1671 = vadd.f32 %v1589, %v1670
        %v1672 = vpop.f32.mrb[0].mxu0
        %1673 = vmatprep.mubr.f32.mxu0 0.0
        %v1674 = vand.u32 %v1264, 4294901760
        %1675 = vmatmul.mubr.f32.gmra.mrb[0].mxu0 %v1674
        %v1676 = vpop.f32.mrb[0].mxu0
        %v1677 = vadd.f32 %v1597, %v1676
        %v1678 = vpop.f32.mrb[0].mxu0
        %1679 = vdwg.mxu0
        %1680 = vmatprep.subr.mxu0 0.0
        %v1681 = vand.u32 %v1267, 4294901760
        %1682 = vmatpush1.msra.mxu0 %v1681
        %1683 = vmatprep.subr.mxu0 0.0
        %1684 = vmatpush1.msra.mxu0 0.0
        %1685 = vmatprep.subr.mxu0 0.0
        %1686 = vmatpush1.msra.mxu0 0.0
        %1687 = vmatprep.subr.mxu0 0.0
        %1688 = vmatpush1.msra.mxu0 0.0
        %1689 = vmatprep.subr.mxu0 0.0
        %1690 = vmatpush1.msra.mxu0 0.0
        %1691 = vmatprep.subr.mxu0 0.0
        %1692 = vmatpush1.msra.mxu0 0.0
        %1693 = vmatprep.subr.mxu0 0.0
        %1694 = vmatpush1.msra.mxu0 0.0
        %1695 = vmatprep.subr.mxu0 0.0
        %1696 = vmatpush1.msra.mxu0 0.0
        %1697 = vmatprep.subr.mxu0 0.0
        %1698 = vmatpush1.msra.mxu0 0.0
        %1699 = vmatprep.subr.mxu0 0.0
        %1700 = vmatpush1.msra.mxu0 0.0
        %1701 = vmatprep.subr.mxu0 0.0
        %1702 = vmatpush1.msra.mxu0 0.0
        %1703 = vmatprep.subr.mxu0 0.0
        %1704 = vmatpush1.msra.mxu0 0.0
        %1705 = vmatprep.subr.mxu0 0.0
        %1706 = vmatpush1.msra.mxu0 0.0
        %1707 = vmatprep.subr.mxu0 0.0
        %1708 = vmatpush1.msra.mxu0 0.0
        %1709 = vmatprep.subr.mxu0 0.0
        %1710 = vmatpush1.msra.mxu0 0.0
        %1711 = vmatprep.subr.mxu0 0.0
        %1712 = vmatpush1.msra.mxu0 0.0
        %1713 = vmatprep.subr.mxu0 0.0
        %1714 = vmatpush1.msra.mxu0 0.0
        %1715 = vmatprep.subr.mxu0 0.0
        %1716 = vmatpush1.msra.mxu0 0.0
        %1717 = vmatprep.subr.mxu0 0.0
        %1718 = vmatpush1.msra.mxu0 0.0
        %1719 = vmatprep.subr.mxu0 0.0
        %1720 = vmatpush1.msra.mxu0 0.0
        %1721 = vmatprep.subr.mxu0 0.0
        %1722 = vmatpush1.msra.mxu0 0.0
        %1723 = vmatprep.subr.mxu0 0.0
        %1724 = vmatpush1.msra.mxu0 0.0
        %1725 = vmatprep.subr.mxu0 0.0
        %1726 = vmatpush1.msra.mxu0 0.0
        %1727 = vmatprep.subr.mxu0 0.0
        %1728 = vmatpush1.msra.mxu0 0.0
        %1729 = vmatprep.subr.mxu0 0.0
        %1730 = vmatpush1.msra.mxu0 0.0
        %1731 = vmatprep.subr.mxu0 0.0
        %1732 = vmatpush1.msra.mxu0 0.0
        %1733 = vmatprep.subr.mxu0 0.0
        %1734 = vmatpush1.msra.mxu0 0.0
        %1735 = vmatprep.subr.mxu0 0.0
        %1736 = vmatpush1.msra.mxu0 0.0
        %1737 = vmatprep.subr.mxu0 0.0
        %1738 = vmatpush1.msra.mxu0 0.0
        %1739 = vmatprep.subr.mxu0 0.0
        %1740 = vmatpush1.msra.mxu0 0.0
        %1741 = vmatprep.subr.mxu0 0.0
        %1742 = vmatpush1.msra.mxu0 0.0
        %1743 = vmatprep.subr.mxu0 0.0
        %1744 = vmatpush1.msra.mxu0 0.0
        %1745 = vmatprep.mubr.f32.mxu0 0.0
        %v1746 = vand.u32 %v1261, 4294901760
        %1747 = vmatmul.mubr.f32.gmra.mrb[0].mxu0 %v1746
        %v1748 = vpop.f32.mrb[0].mxu0
        %v1749 = vadd.f32 %v1671, %v1748
        %v1750 = vpop.f32.mrb[0].mxu0
        %1751 = vmatprep.mubr.f32.mxu0 0.0
        %v1752 = vand.u32 %v1264, 4294901760
        %1753 = vmatmul.mubr.f32.gmra.mrb[0].mxu0 %v1752
        %v1754 = vpop.f32.mrb[0].mxu0
        %v1755 = vadd.f32 %v1677, %v1754
        %v1756 = vpop.f32.mrb[0].mxu0
        %1757 = vdwg.mxu0
        %v1758 = vadd.f32 %v1248, %v1749
        %v1759 = vadd.f32 %v1249, %v1755
        %1760 = vst [vmem:[#allocation2] sm:$0xff] %v1758
        %1761 = vst [vmem:[#allocation2 + $0x8] sm:$0xff] %v1759
        %v1762 = vld [vmem:[#allocation2] ss:$2 sm:$0xff]
        %s1763 = scalar_lea.vmem [#allocation2], 1
        %v1764 = vld [vmem:[%s1763] ss:$2 sm:$0xff]
        %v1765 = vmax.f32 %v1762, %v1764
        %v1766 = vmul.f32 %v1765, 0.5
        %v1767 = vmul.f32 %v1765, 0.70710677
        %v1768 = vand.u32 2147483647, %v1767
        %v1769 = vmul.f32 %v1768, 0.3275911
        %v1770 = vadd.f32 %v1769, 1.0
        %v1771 = vrcp.pop %v1770
        %v1772 = vmul.f32 1.0, %v1771
        %v1773 = vmul.f32 %v1772, 1.0614054
        %v1774 = vadd.f32 %v1773, -1.4531521
        %v1775 = vmul.f32 %v1772, %v1774
        %v1776 = vadd.f32 %v1775, 1.4214138
        %v1777 = vmul.f32 %v1772, %v1776
        %v1778 = vadd.f32 %v1777, -0.28449672
        %v1779 = vmul.f32 %v1772, %v1778
        %v1780 = vadd.f32 %v1779, 0.2548296
        %v1781 = vmul.f32 %v1772, %v1780
        %v1782 = vmul.f32 %v1768, %v1768
        %v1783 = vsub.f32 0.0, %v1782
        %v1784 = vmul.f32 %v1783, 1.442695
        %v1785 = vpow.pop %v1784
        %v1786 = vmul.f32 %v1781, %v1785
        %v1787 = vsub.f32 1.0, %v1786
        %vm1788 = vcmp.lt.f32.partialorder %v1767, 0.0
        %v1789 = vsub.f32 0.0, %v1787
        %v1790 = vsel %vm1788, %v1789, %v1787
        %v1791 = vadd.f32 %v1790, 1.0
        %v1792 = vmul.f32 %v1766, %v1791
        %v1793 = vand.u32 %v226, 7
        %v1794 = vrot.slane %v1792, 6
        %vm1795 = vcmp.ge.s32.totalorder %v1793, 2
        %v1796 = vsel %vm1795, %v1794, 0.0
        %v1797 = vrot.slane %v1792, 7
        %vm1798 = vcmp.ge.s32.totalorder %v1793, 1
        %v1799 = vsel %vm1798, %v1797, 0.0
        %1800 = vrot.lane.b32.xlu0 %v1799, 20
        %v1801 = vpop.permute.xlu0 %1800
        %v1802 = vadd.f32 %v1796, %v1801
        %1803 = vrot.lane.b32.xlu0 %v1792, 40
        %v1804 = vpop.permute.xlu0 %1803
        %v1805 = vadd.f32 %v1802, %v1804
        %v1806 = vrot.slane %v1792, 1
        %vm1807 = vcmp.lt.s32.totalorder %v1793, 7
        %v1808 = vsel %vm1807, %v1806, 0.0
        %1809 = vrot.lane.b32.xlu0 %v1808, 60
        %v1810 = vpop.permute.xlu0 %1809
        %v1811 = vadd.f32 %v1805, %v1810
        %v1812 = vrot.slane %v1792, 2
        %vm1813 = vcmp.lt.s32.totalorder %v1793, 6
        %v1814 = vsel %vm1813, %v1812, 0.0
        %1815 = vrot.lane.b32.xlu0 %v1814, 80
        %v1816 = vpop.permute.xlu0 %1815
        %v1817 = vadd.f32 %v1811, %v1816
        %v1818 = vld [vmem:[%s3] sm:$0xff]
        %v1819 = vld [vmem:[%s3 + $0x8] sm:$0xff]
        %v1820 = vld [vmem:[%s3 + $0x10] sm:$0xff]
        %v1821 = vld [vmem:[%s3 + $0x18] sm:$0xff]
        %v1822 = vld [vmem:[%s3 + $0x20] sm:$0xff]
        %v1823 = vld [vmem:[%s3 + $0x28] sm:$0xff]
        %v1824 = vld [vmem:[%s3 + $0x30] sm:$0xff]
        %v1825 = vld [vmem:[%s3 + $0x38] sm:$0xff]
        %v1826 = vld [vmem:[%s3 + $0x40] sm:$0xff]
        %v1827 = vld [vmem:[%s3 + $0x48] sm:$0xff]
        %v1828 = vld [vmem:[%s3 + $0x50] sm:$0xff]
        %v1829 = vld [vmem:[%s3 + $0x58] sm:$0xff]
        %v1830 = vld [vmem:[%s3 + $0x60] sm:$0xff]
        %v1831 = vld [vmem:[%s3 + $0x68] sm:$0xff]
        %v1832 = vld [vmem:[%s3 + $0x70] sm:$0xff]
        %v1833 = vld [vmem:[%s3 + $0x78] sm:$0xff]
        %v1834 = vld [vmem:[%s4] sm:$0x1]
        %v1836 = vlaneseq
        %v1837 = vshrl.u32 %v1836, 7
        %v1838 = vsub.s32 0, %v1837
        %v1839 = vrot.slane %v1834, %v1838
        %1841 = vmatprep.subr.mxu0 0.0
        %v1842 = vand.u32 %v1818, 4294901760
        %1843 = vmatpush1.msra.mxu0 %v1842
        %1844 = vmatprep.subr.mxu0 0.0
        %v1845 = vand.u32 %v1819, 4294901760
        %1846 = vmatpush1.msra.mxu0 %v1845
        %1847 = vmatprep.subr.mxu0 0.0
        %v1848 = vand.u32 %v1820, 4294901760
        %1849 = vmatpush1.msra.mxu0 %v1848
        %1850 = vmatprep.subr.mxu0 0.0
        %v1851 = vand.u32 %v1821, 4294901760
        %1852 = vmatpush1.msra.mxu0 %v1851
        %1853 = vmatprep.subr.mxu0 0.0
        %v1854 = vand.u32 %v1822, 4294901760
        %1855 = vmatpush1.msra.mxu0 %v1854
        %1856 = vmatprep.subr.mxu0 0.0
        %v1857 = vand.u32 %v1823, 4294901760
        %1858 = vmatpush1.msra.mxu0 %v1857
        %1859 = vmatprep.subr.mxu0 0.0
        %v1860 = vand.u32 %v1824, 4294901760
        %1861 = vmatpush1.msra.mxu0 %v1860
        %1862 = vmatprep.subr.mxu0 0.0
        %v1863 = vand.u32 %v1825, 4294901760
        %1864 = vmatpush1.msra.mxu0 %v1863
        %1865 = vmatprep.subr.mxu0 0.0
        %v1866 = vand.u32 %v1826, 4294901760
        %1867 = vmatpush1.msra.mxu0 %v1866
        %1868 = vmatprep.subr.mxu0 0.0
        %v1869 = vand.u32 %v1827, 4294901760
        %1870 = vmatpush1.msra.mxu0 %v1869
        %1871 = vmatprep.subr.mxu0 0.0
        %v1872 = vand.u32 %v1828, 4294901760
        %1873 = vmatpush1.msra.mxu0 %v1872
        %1874 = vmatprep.subr.mxu0 0.0
        %v1875 = vand.u32 %v1829, 4294901760
        %1876 = vmatpush1.msra.mxu0 %v1875
        %1877 = vmatprep.subr.mxu0 0.0
        %v1878 = vand.u32 %v1830, 4294901760
        %1879 = vmatpush1.msra.mxu0 %v1878
        %1880 = vmatprep.subr.mxu0 0.0
        %v1881 = vand.u32 %v1831, 4294901760
        %1882 = vmatpush1.msra.mxu0 %v1881
        %1883 = vmatprep.subr.mxu0 0.0
        %v1884 = vand.u32 %v1832, 4294901760
        %1885 = vmatpush1.msra.mxu0 %v1884
        %1886 = vmatprep.subr.mxu0 0.0
        %v1887 = vand.u32 %v1833, 4294901760
        %1888 = vmatpush1.msra.mxu0 %v1887
        %1889 = vmatprep.subr.mxu0 0.0
        %1890 = vmatpush1.msra.mxu0 0.0
        %1891 = vmatprep.subr.mxu0 0.0
        %1892 = vmatpush1.msra.mxu0 0.0
        %1893 = vmatprep.subr.mxu0 0.0
        %1894 = vmatpush1.msra.mxu0 0.0
        %1895 = vmatprep.subr.mxu0 0.0
        %1896 = vmatpush1.msra.mxu0 0.0
        %1897 = vmatprep.subr.mxu0 0.0
        %1898 = vmatpush1.msra.mxu0 0.0
        %1899 = vmatprep.subr.mxu0 0.0
        %1900 = vmatpush1.msra.mxu0 0.0
        %1901 = vmatprep.subr.mxu0 0.0
        %1902 = vmatpush1.msra.mxu0 0.0
        %1903 = vmatprep.subr.mxu0 0.0
        %1904 = vmatpush1.msra.mxu0 0.0
        %1905 = vmatprep.subr.mxu0 0.0
        %1906 = vmatpush1.msra.mxu0 0.0
        %1907 = vmatprep.subr.mxu0 0.0
        %1908 = vmatpush1.msra.mxu0 0.0
        %1909 = vmatprep.subr.mxu0 0.0
        %1910 = vmatpush1.msra.mxu0 0.0
        %1911 = vmatprep.subr.mxu0 0.0
        %1912 = vmatpush1.msra.mxu0 0.0
        %1913 = vmatprep.subr.mxu0 0.0
        %1914 = vmatpush1.msra.mxu0 0.0
        %1915 = vmatprep.subr.mxu0 0.0
        %1916 = vmatpush1.msra.mxu0 0.0
        %1917 = vmatprep.subr.mxu0 0.0
        %1918 = vmatpush1.msra.mxu0 0.0
        %1919 = vmatprep.subr.mxu0 0.0
        %1920 = vmatpush1.msra.mxu0 0.0
        %1921 = vmatprep.mubr.f32.mxu0 0.0
        %v1922 = vand.u32 %v1817, 4294901760
        %v1923 = vsub.f32 %v1817, %v1922
        %v1924 = vand.u32 %v1923, 4294901760
        %v1925 = vsub.f32 %v1923, %v1924
        %v1926 = vand.u32 %v1925, 4294901760
        %1927 = vmatmul.mubr.f32.gmra.mrb[0].mxu0 %v1926
        %v1928 = vpop.f32.mrb[0].mxu0
        %v1929 = vadd.f32 %v1839, %v1928
        %v1930 = vpop.f32.mrb[0].mxu0
        %1931 = vdwg.mxu0
        %1932 = vmatprep.subr.mxu0 0.0
        %v1933 = vand.u32 %v1818, 4294901760
        %v1934 = vsub.f32 %v1818, %v1933
        %v1935 = vand.u32 %v1934, 4294901760
        %v1936 = vsub.f32 %v1934, %v1935
        %v1937 = vand.u32 %v1936, 4294901760
        %1938 = vmatpush1.msra.mxu0 %v1937
        %1939 = vmatprep.subr.mxu0 0.0
        %v1940 = vand.u32 %v1819, 4294901760
        %v1941 = vsub.f32 %v1819, %v1940
        %v1942 = vand.u32 %v1941, 4294901760
        %v1943 = vsub.f32 %v1941, %v1942
        %v1944 = vand.u32 %v1943, 4294901760
        %1945 = vmatpush1.msra.mxu0 %v1944
        %1946 = vmatprep.subr.mxu0 0.0
        %v1947 = vand.u32 %v1820, 4294901760
        %v1948 = vsub.f32 %v1820, %v1947
        %v1949 = vand.u32 %v1948, 4294901760
        %v1950 = vsub.f32 %v1948, %v1949
        %v1951 = vand.u32 %v1950, 4294901760
        %1952 = vmatpush1.msra.mxu0 %v1951
        %1953 = vmatprep.subr.mxu0 0.0
        %v1954 = vand.u32 %v1821, 4294901760
        %v1955 = vsub.f32 %v1821, %v1954
        %v1956 = vand.u32 %v1955, 4294901760
        %v1957 = vsub.f32 %v1955, %v1956
        %v1958 = vand.u32 %v1957, 4294901760
        %1959 = vmatpush1.msra.mxu0 %v1958
        %1960 = vmatprep.subr.mxu0 0.0
        %v1961 = vand.u32 %v1822, 4294901760
        %v1962 = vsub.f32 %v1822, %v1961
        %v1963 = vand.u32 %v1962, 4294901760
        %v1964 = vsub.f32 %v1962, %v1963
        %v1965 = vand.u32 %v1964, 4294901760
        %1966 = vmatpush1.msra.mxu0 %v1965
        %1967 = vmatprep.subr.mxu0 0.0
        %v1968 = vand.u32 %v1823, 4294901760
        %v1969 = vsub.f32 %v1823, %v1968
        %v1970 = vand.u32 %v1969, 4294901760
        %v1971 = vsub.f32 %v1969, %v1970
        %v1972 = vand.u32 %v1971, 4294901760
        %1973 = vmatpush1.msra.mxu0 %v1972
        %1974 = vmatprep.subr.mxu0 0.0
        %v1975 = vand.u32 %v1824, 4294901760
        %v1976 = vsub.f32 %v1824, %v1975
        %v1977 = vand.u32 %v1976, 4294901760
        %v1978 = vsub.f32 %v1976, %v1977
        %v1979 = vand.u32 %v1978, 4294901760
        %1980 = vmatpush1.msra.mxu0 %v1979
        %1981 = vmatprep.subr.mxu0 0.0
        %v1982 = vand.u32 %v1825, 4294901760
        %v1983 = vsub.f32 %v1825, %v1982
        %v1984 = vand.u32 %v1983, 4294901760
        %v1985 = vsub.f32 %v1983, %v1984
        %v1986 = vand.u32 %v1985, 4294901760
        %1987 = vmatpush1.msra.mxu0 %v1986
        %1988 = vmatprep.subr.mxu0 0.0
        %v1989 = vand.u32 %v1826, 4294901760
        %v1990 = vsub.f32 %v1826, %v1989
        %v1991 = vand.u32 %v1990, 4294901760
        %v1992 = vsub.f32 %v1990, %v1991
        %v1993 = vand.u32 %v1992, 4294901760
        %1994 = vmatpush1.msra.mxu0 %v1993
        %1995 = vmatprep.subr.mxu0 0.0
        %v1996 = vand.u32 %v1827, 4294901760
        %v1997 = vsub.f32 %v1827, %v1996
        %v1998 = vand.u32 %v1997, 4294901760
        %v1999 = vsub.f32 %v1997, %v1998
        %v2000 = vand.u32 %v1999, 4294901760
        %2001 = vmatpush1.msra.mxu0 %v2000
        %2002 = vmatprep.subr.mxu0 0.0
        %v2003 = vand.u32 %v1828, 4294901760
        %v2004 = vsub.f32 %v1828, %v2003
        %v2005 = vand.u32 %v2004, 4294901760
        %v2006 = vsub.f32 %v2004, %v2005
        %v2007 = vand.u32 %v2006, 4294901760
        %2008 = vmatpush1.msra.mxu0 %v2007
        %2009 = vmatprep.subr.mxu0 0.0
        %v2010 = vand.u32 %v1829, 4294901760
        %v2011 = vsub.f32 %v1829, %v2010
        %v2012 = vand.u32 %v2011, 4294901760
        %v2013 = vsub.f32 %v2011, %v2012
        %v2014 = vand.u32 %v2013, 4294901760
        %2015 = vmatpush1.msra.mxu0 %v2014
        %2016 = vmatprep.subr.mxu0 0.0
        %v2017 = vand.u32 %v1830, 4294901760
        %v2018 = vsub.f32 %v1830, %v2017
        %v2019 = vand.u32 %v2018, 4294901760
        %v2020 = vsub.f32 %v2018, %v2019
        %v2021 = vand.u32 %v2020, 4294901760
        %2022 = vmatpush1.msra.mxu0 %v2021
        %2023 = vmatprep.subr.mxu0 0.0
        %v2024 = vand.u32 %v1831, 4294901760
        %v2025 = vsub.f32 %v1831, %v2024
        %v2026 = vand.u32 %v2025, 4294901760
        %v2027 = vsub.f32 %v2025, %v2026
        %v2028 = vand.u32 %v2027, 4294901760
        %2029 = vmatpush1.msra.mxu0 %v2028
        %2030 = vmatprep.subr.mxu0 0.0
        %v2031 = vand.u32 %v1832, 4294901760
        %v2032 = vsub.f32 %v1832, %v2031
        %v2033 = vand.u32 %v2032, 4294901760
        %v2034 = vsub.f32 %v2032, %v2033
        %v2035 = vand.u32 %v2034, 4294901760
        %2036 = vmatpush1.msra.mxu0 %v2035
        %2037 = vmatprep.subr.mxu0 0.0
        %v2038 = vand.u32 %v1833, 4294901760
        %v2039 = vsub.f32 %v1833, %v2038
        %v2040 = vand.u32 %v2039, 4294901760
        %v2041 = vsub.f32 %v2039, %v2040
        %v2042 = vand.u32 %v2041, 4294901760
        %2043 = vmatpush1.msra.mxu0 %v2042
        %2044 = vmatprep.subr.mxu0 0.0
        %2045 = vmatpush1.msra.mxu0 0.0
        %2046 = vmatprep.subr.mxu0 0.0
        %2047 = vmatpush1.msra.mxu0 0.0
        %2048 = vmatprep.subr.mxu0 0.0
        %2049 = vmatpush1.msra.mxu0 0.0
        %2050 = vmatprep.subr.mxu0 0.0
        %2051 = vmatpush1.msra.mxu0 0.0
        %2052 = vmatprep.subr.mxu0 0.0
        %2053 = vmatpush1.msra.mxu0 0.0
        %2054 = vmatprep.subr.mxu0 0.0
        %2055 = vmatpush1.msra.mxu0 0.0
        %2056 = vmatprep.subr.mxu0 0.0
        %2057 = vmatpush1.msra.mxu0 0.0
        %2058 = vmatprep.subr.mxu0 0.0
        %2059 = vmatpush1.msra.mxu0 0.0
        %2060 = vmatprep.subr.mxu0 0.0
        %2061 = vmatpush1.msra.mxu0 0.0
        %2062 = vmatprep.subr.mxu0 0.0
        %2063 = vmatpush1.msra.mxu0 0.0
        %2064 = vmatprep.subr.mxu0 0.0
        %2065 = vmatpush1.msra.mxu0 0.0
        %2066 = vmatprep.subr.mxu0 0.0
        %2067 = vmatpush1.msra.mxu0 0.0
        %2068 = vmatprep.subr.mxu0 0.0
        %2069 = vmatpush1.msra.mxu0 0.0
        %2070 = vmatprep.subr.mxu0 0.0
        %2071 = vmatpush1.msra.mxu0 0.0
        %2072 = vmatprep.subr.mxu0 0.0
        %2073 = vmatpush1.msra.mxu0 0.0
        %2074 = vmatprep.subr.mxu0 0.0
        %2075 = vmatpush1.msra.mxu0 0.0
        %2076 = vmatprep.mubr.f32.mxu0 0.0
        %v2077 = vand.u32 %v1817, 4294901760
        %2078 = vmatmul.mubr.f32.gmra.mrb[0].mxu0 %v2077
        %v2079 = vpop.f32.mrb[0].mxu0
        %v2080 = vadd.f32 %v1929, %v2079
        %v2081 = vpop.f32.mrb[0].mxu0
        %2082 = vdwg.mxu0
        %2083 = vmatprep.subr.mxu0 0.0
        %v2084 = vand.u32 %v1818, 4294901760
        %v2085 = vsub.f32 %v1818, %v2084
        %2086 = vmatpush1.msra.mxu0 %v2085
        %2087 = vmatprep.subr.mxu0 0.0
        %v2088 = vand.u32 %v1819, 4294901760
        %v2089 = vsub.f32 %v1819, %v2088
        %2090 = vmatpush1.msra.mxu0 %v2089
        %2091 = vmatprep.subr.mxu0 0.0
        %v2092 = vand.u32 %v1820, 4294901760
        %v2093 = vsub.f32 %v1820, %v2092
        %2094 = vmatpush1.msra.mxu0 %v2093
        %2095 = vmatprep.subr.mxu0 0.0
        %v2096 = vand.u32 %v1821, 4294901760
        %v2097 = vsub.f32 %v1821, %v2096
        %2098 = vmatpush1.msra.mxu0 %v2097
        %2099 = vmatprep.subr.mxu0 0.0
        %v2100 = vand.u32 %v1822, 4294901760
        %v2101 = vsub.f32 %v1822, %v2100
        %2102 = vmatpush1.msra.mxu0 %v2101
        %2103 = vmatprep.subr.mxu0 0.0
        %v2104 = vand.u32 %v1823, 4294901760
        %v2105 = vsub.f32 %v1823, %v2104
        %2106 = vmatpush1.msra.mxu0 %v2105
        %2107 = vmatprep.subr.mxu0 0.0
        %v2108 = vand.u32 %v1824, 4294901760
        %v2109 = vsub.f32 %v1824, %v2108
        %2110 = vmatpush1.msra.mxu0 %v2109
        %2111 = vmatprep.subr.mxu0 0.0
        %v2112 = vand.u32 %v1825, 4294901760
        %v2113 = vsub.f32 %v1825, %v2112
        %2114 = vmatpush1.msra.mxu0 %v2113
        %2115 = vmatprep.subr.mxu0 0.0
        %v2116 = vand.u32 %v1826, 4294901760
        %v2117 = vsub.f32 %v1826, %v2116
        %2118 = vmatpush1.msra.mxu0 %v2117
        %2119 = vmatprep.subr.mxu0 0.0
        %v2120 = vand.u32 %v1827, 4294901760
        %v2121 = vsub.f32 %v1827, %v2120
        %2122 = vmatpush1.msra.mxu0 %v2121
        %2123 = vmatprep.subr.mxu0 0.0
        %v2124 = vand.u32 %v1828, 4294901760
        %v2125 = vsub.f32 %v1828, %v2124
        %2126 = vmatpush1.msra.mxu0 %v2125
        %2127 = vmatprep.subr.mxu0 0.0
        %v2128 = vand.u32 %v1829, 4294901760
        %v2129 = vsub.f32 %v1829, %v2128
        %2130 = vmatpush1.msra.mxu0 %v2129
        %2131 = vmatprep.subr.mxu0 0.0
        %v2132 = vand.u32 %v1830, 4294901760
        %v2133 = vsub.f32 %v1830, %v2132
        %2134 = vmatpush1.msra.mxu0 %v2133
        %2135 = vmatprep.subr.mxu0 0.0
        %v2136 = vand.u32 %v1831, 4294901760
        %v2137 = vsub.f32 %v1831, %v2136
        %2138 = vmatpush1.msra.mxu0 %v2137
        %2139 = vmatprep.subr.mxu0 0.0
        %v2140 = vand.u32 %v1832, 4294901760
        %v2141 = vsub.f32 %v1832, %v2140
        %2142 = vmatpush1.msra.mxu0 %v2141
        %2143 = vmatprep.subr.mxu0 0.0
        %v2144 = vand.u32 %v1833, 4294901760
        %v2145 = vsub.f32 %v1833, %v2144
        %2146 = vmatpush1.msra.mxu0 %v2145
        %2147 = vmatprep.subr.mxu0 0.0
        %2148 = vmatpush1.msra.mxu0 0.0
        %2149 = vmatprep.subr.mxu0 0.0
        %2150 = vmatpush1.msra.mxu0 0.0
        %2151 = vmatprep.subr.mxu0 0.0
        %2152 = vmatpush1.msra.mxu0 0.0
        %2153 = vmatprep.subr.mxu0 0.0
        %2154 = vmatpush1.msra.mxu0 0.0
        %2155 = vmatprep.subr.mxu0 0.0
        %2156 = vmatpush1.msra.mxu0 0.0
        %2157 = vmatprep.subr.mxu0 0.0
        %2158 = vmatpush1.msra.mxu0 0.0
        %2159 = vmatprep.subr.mxu0 0.0
        %2160 = vmatpush1.msra.mxu0 0.0
        %2161 = vmatprep.subr.mxu0 0.0
        %2162 = vmatpush1.msra.mxu0 0.0
        %2163 = vmatprep.subr.mxu0 0.0
        %2164 = vmatpush1.msra.mxu0 0.0
        %2165 = vmatprep.subr.mxu0 0.0
        %2166 = vmatpush1.msra.mxu0 0.0
        %2167 = vmatprep.subr.mxu0 0.0
        %2168 = vmatpush1.msra.mxu0 0.0
        %2169 = vmatprep.subr.mxu0 0.0
        %2170 = vmatpush1.msra.mxu0 0.0
        %2171 = vmatprep.subr.mxu0 0.0
        %2172 = vmatpush1.msra.mxu0 0.0
        %2173 = vmatprep.subr.mxu0 0.0
        %2174 = vmatpush1.msra.mxu0 0.0
        %2175 = vmatprep.subr.mxu0 0.0
        %2176 = vmatpush1.msra.mxu0 0.0
        %2177 = vmatprep.subr.mxu0 0.0
        %2178 = vmatpush1.msra.mxu0 0.0
        %2179 = vmatprep.mubr.f32.mxu0 0.0
        %v2180 = vand.u32 %v1817, 4294901760
        %v2181 = vsub.f32 %v1817, %v2180
        %2182 = vmatmul.mubr.f32.gmra.mrb[0].mxu0 %v2181
        %v2183 = vpop.f32.mrb[0].mxu0
        %v2184 = vadd.f32 %v2080, %v2183
        %v2185 = vpop.f32.mrb[0].mxu0
        %2186 = vdwg.mxu0
        %2187 = vmatprep.subr.mxu0 0.0
        %v2188 = vand.u32 %v1818, 4294901760
        %2189 = vmatpush1.msra.mxu0 %v2188
        %2190 = vmatprep.subr.mxu0 0.0
        %v2191 = vand.u32 %v1819, 4294901760
        %2192 = vmatpush1.msra.mxu0 %v2191
        %2193 = vmatprep.subr.mxu0 0.0
        %v2194 = vand.u32 %v1820, 4294901760
        %2195 = vmatpush1.msra.mxu0 %v2194
        %2196 = vmatprep.subr.mxu0 0.0
        %v2197 = vand.u32 %v1821, 4294901760
        %2198 = vmatpush1.msra.mxu0 %v2197
        %2199 = vmatprep.subr.mxu0 0.0
        %v2200 = vand.u32 %v1822, 4294901760
        %2201 = vmatpush1.msra.mxu0 %v2200
        %2202 = vmatprep.subr.mxu0 0.0
        %v2203 = vand.u32 %v1823, 4294901760
        %2204 = vmatpush1.msra.mxu0 %v2203
        %2205 = vmatprep.subr.mxu0 0.0
        %v2206 = vand.u32 %v1824, 4294901760
        %2207 = vmatpush1.msra.mxu0 %v2206
        %2208 = vmatprep.subr.mxu0 0.0
        %v2209 = vand.u32 %v1825, 4294901760
        %2210 = vmatpush1.msra.mxu0 %v2209
        %2211 = vmatprep.subr.mxu0 0.0
        %v2212 = vand.u32 %v1826, 4294901760
        %2213 = vmatpush1.msra.mxu0 %v2212
        %2214 = vmatprep.subr.mxu0 0.0
        %v2215 = vand.u32 %v1827, 4294901760
        %2216 = vmatpush1.msra.mxu0 %v2215
        %2217 = vmatprep.subr.mxu0 0.0
        %v2218 = vand.u32 %v1828, 4294901760
        %2219 = vmatpush1.msra.mxu0 %v2218
        %2220 = vmatprep.subr.mxu0 0.0
        %v2221 = vand.u32 %v1829, 4294901760
        %2222 = vmatpush1.msra.mxu0 %v2221
        %2223 = vmatprep.subr.mxu0 0.0
        %v2224 = vand.u32 %v1830, 4294901760
        %2225 = vmatpush1.msra.mxu0 %v2224
        %2226 = vmatprep.subr.mxu0 0.0
        %v2227 = vand.u32 %v1831, 4294901760
        %2228 = vmatpush1.msra.mxu0 %v2227
        %2229 = vmatprep.subr.mxu0 0.0
        %v2230 = vand.u32 %v1832, 4294901760
        %2231 = vmatpush1.msra.mxu0 %v2230
        %2232 = vmatprep.subr.mxu0 0.0
        %v2233 = vand.u32 %v1833, 4294901760
        %2234 = vmatpush1.msra.mxu0 %v2233
        %2235 = vmatprep.subr.mxu0 0.0
        %2236 = vmatpush1.msra.mxu0 0.0
        %2237 = vmatprep.subr.mxu0 0.0
        %2238 = vmatpush1.msra.mxu0 0.0
        %2239 = vmatprep.subr.mxu0 0.0
        %2240 = vmatpush1.msra.mxu0 0.0
        %2241 = vmatprep.subr.mxu0 0.0
        %2242 = vmatpush1.msra.mxu0 0.0
        %2243 = vmatprep.subr.mxu0 0.0
        %2244 = vmatpush1.msra.mxu0 0.0
        %2245 = vmatprep.subr.mxu0 0.0
        %2246 = vmatpush1.msra.mxu0 0.0
        %2247 = vmatprep.subr.mxu0 0.0
        %2248 = vmatpush1.msra.mxu0 0.0
        %2249 = vmatprep.subr.mxu0 0.0
        %2250 = vmatpush1.msra.mxu0 0.0
        %2251 = vmatprep.subr.mxu0 0.0
        %2252 = vmatpush1.msra.mxu0 0.0
        %2253 = vmatprep.subr.mxu0 0.0
        %2254 = vmatpush1.msra.mxu0 0.0
        %2255 = vmatprep.subr.mxu0 0.0
        %2256 = vmatpush1.msra.mxu0 0.0
        %2257 = vmatprep.subr.mxu0 0.0
        %2258 = vmatpush1.msra.mxu0 0.0
        %2259 = vmatprep.subr.mxu0 0.0
        %2260 = vmatpush1.msra.mxu0 0.0
        %2261 = vmatprep.subr.mxu0 0.0
        %2262 = vmatpush1.msra.mxu0 0.0
        %2263 = vmatprep.subr.mxu0 0.0
        %2264 = vmatpush1.msra.mxu0 0.0
        %2265 = vmatprep.subr.mxu0 0.0
        %2266 = vmatpush1.msra.mxu0 0.0
        %2267 = vmatprep.mubr.f32.mxu0 0.0
        %v2268 = vand.u32 %v1817, 4294901760
        %v2269 = vsub.f32 %v1817, %v2268
        %v2270 = vand.u32 %v2269, 4294901760
        %2271 = vmatmul.mubr.f32.gmra.mrb[0].mxu0 %v2270
        %v2272 = vpop.f32.mrb[0].mxu0
        %v2273 = vadd.f32 %v2184, %v2272
        %v2274 = vpop.f32.mrb[0].mxu0
        %2275 = vdwg.mxu0
        %2276 = vmatprep.subr.mxu0 0.0
        %v2277 = vand.u32 %v1818, 4294901760
        %v2278 = vsub.f32 %v1818, %v2277
        %v2279 = vand.u32 %v2278, 4294901760
        %2280 = vmatpush1.msra.mxu0 %v2279
        %2281 = vmatprep.subr.mxu0 0.0
        %v2282 = vand.u32 %v1819, 4294901760
        %v2283 = vsub.f32 %v1819, %v2282
        %v2284 = vand.u32 %v2283, 4294901760
        %2285 = vmatpush1.msra.mxu0 %v2284
        %2286 = vmatprep.subr.mxu0 0.0
        %v2287 = vand.u32 %v1820, 4294901760
        %v2288 = vsub.f32 %v1820, %v2287
        %v2289 = vand.u32 %v2288, 4294901760
        %2290 = vmatpush1.msra.mxu0 %v2289
        %2291 = vmatprep.subr.mxu0 0.0
        %v2292 = vand.u32 %v1821, 4294901760
        %v2293 = vsub.f32 %v1821, %v2292
        %v2294 = vand.u32 %v2293, 4294901760
        %2295 = vmatpush1.msra.mxu0 %v2294
        %2296 = vmatprep.subr.mxu0 0.0
        %v2297 = vand.u32 %v1822, 4294901760
        %v2298 = vsub.f32 %v1822, %v2297
        %v2299 = vand.u32 %v2298, 4294901760
        %2300 = vmatpush1.msra.mxu0 %v2299
        %2301 = vmatprep.subr.mxu0 0.0
        %v2302 = vand.u32 %v1823, 4294901760
        %v2303 = vsub.f32 %v1823, %v2302
        %v2304 = vand.u32 %v2303, 4294901760
        %2305 = vmatpush1.msra.mxu0 %v2304
        %2306 = vmatprep.subr.mxu0 0.0
        %v2307 = vand.u32 %v1824, 4294901760
        %v2308 = vsub.f32 %v1824, %v2307
        %v2309 = vand.u32 %v2308, 4294901760
        %2310 = vmatpush1.msra.mxu0 %v2309
        %2311 = vmatprep.subr.mxu0 0.0
        %v2312 = vand.u32 %v1825, 4294901760
        %v2313 = vsub.f32 %v1825, %v2312
        %v2314 = vand.u32 %v2313, 4294901760
        %2315 = vmatpush1.msra.mxu0 %v2314
        %2316 = vmatprep.subr.mxu0 0.0
        %v2317 = vand.u32 %v1826, 4294901760
        %v2318 = vsub.f32 %v1826, %v2317
        %v2319 = vand.u32 %v2318, 4294901760
        %2320 = vmatpush1.msra.mxu0 %v2319
        %2321 = vmatprep.subr.mxu0 0.0
        %v2322 = vand.u32 %v1827, 4294901760
        %v2323 = vsub.f32 %v1827, %v2322
        %v2324 = vand.u32 %v2323, 4294901760
        %2325 = vmatpush1.msra.mxu0 %v2324
        %2326 = vmatprep.subr.mxu0 0.0
        %v2327 = vand.u32 %v1828, 4294901760
        %v2328 = vsub.f32 %v1828, %v2327
        %v2329 = vand.u32 %v2328, 4294901760
        %2330 = vmatpush1.msra.mxu0 %v2329
        %2331 = vmatprep.subr.mxu0 0.0
        %v2332 = vand.u32 %v1829, 4294901760
        %v2333 = vsub.f32 %v1829, %v2332
        %v2334 = vand.u32 %v2333, 4294901760
        %2335 = vmatpush1.msra.mxu0 %v2334
        %2336 = vmatprep.subr.mxu0 0.0
        %v2337 = vand.u32 %v1830, 4294901760
        %v2338 = vsub.f32 %v1830, %v2337
        %v2339 = vand.u32 %v2338, 4294901760
        %2340 = vmatpush1.msra.mxu0 %v2339
        %2341 = vmatprep.subr.mxu0 0.0
        %v2342 = vand.u32 %v1831, 4294901760
        %v2343 = vsub.f32 %v1831, %v2342
        %v2344 = vand.u32 %v2343, 4294901760
        %2345 = vmatpush1.msra.mxu0 %v2344
        %2346 = vmatprep.subr.mxu0 0.0
        %v2347 = vand.u32 %v1832, 4294901760
        %v2348 = vsub.f32 %v1832, %v2347
        %v2349 = vand.u32 %v2348, 4294901760
        %2350 = vmatpush1.msra.mxu0 %v2349
        %2351 = vmatprep.subr.mxu0 0.0
        %v2352 = vand.u32 %v1833, 4294901760
        %v2353 = vsub.f32 %v1833, %v2352
        %v2354 = vand.u32 %v2353, 4294901760
        %2355 = vmatpush1.msra.mxu0 %v2354
        %2356 = vmatprep.subr.mxu0 0.0
        %2357 = vmatpush1.msra.mxu0 0.0
        %2358 = vmatprep.subr.mxu0 0.0
        %2359 = vmatpush1.msra.mxu0 0.0
        %2360 = vmatprep.subr.mxu0 0.0
        %2361 = vmatpush1.msra.mxu0 0.0
        %2362 = vmatprep.subr.mxu0 0.0
        %2363 = vmatpush1.msra.mxu0 0.0
        %2364 = vmatprep.subr.mxu0 0.0
        %2365 = vmatpush1.msra.mxu0 0.0
        %2366 = vmatprep.subr.mxu0 0.0
        %2367 = vmatpush1.msra.mxu0 0.0
        %2368 = vmatprep.subr.mxu0 0.0
        %2369 = vmatpush1.msra.mxu0 0.0
        %2370 = vmatprep.subr.mxu0 0.0
        %2371 = vmatpush1.msra.mxu0 0.0
        %2372 = vmatprep.subr.mxu0 0.0
        %2373 = vmatpush1.msra.mxu0 0.0
        %2374 = vmatprep.subr.mxu0 0.0
        %2375 = vmatpush1.msra.mxu0 0.0
        %2376 = vmatprep.subr.mxu0 0.0
        %2377 = vmatpush1.msra.mxu0 0.0
        %2378 = vmatprep.subr.mxu0 0.0
        %2379 = vmatpush1.msra.mxu0 0.0
        %2380 = vmatprep.subr.mxu0 0.0
        %2381 = vmatpush1.msra.mxu0 0.0
        %2382 = vmatprep.subr.mxu0 0.0
        %2383 = vmatpush1.msra.mxu0 0.0
        %2384 = vmatprep.subr.mxu0 0.0
        %2385 = vmatpush1.msra.mxu0 0.0
        %2386 = vmatprep.subr.mxu0 0.0
        %2387 = vmatpush1.msra.mxu0 0.0
        %2388 = vmatprep.mubr.f32.mxu0 0.0
        %v2389 = vand.u32 %v1817, 4294901760
        %2390 = vmatmul.mubr.f32.gmra.mrb[0].mxu0 %v2389
        %v2391 = vpop.f32.mrb[0].mxu0
        %v2392 = vadd.f32 %v2273, %v2391
        %v2393 = vpop.f32.mrb[0].mxu0
        %2394 = vdwg.mxu0
        %2395 = vmatprep.subr.mxu0 0.0
        %v2396 = vand.u32 %v1818, 4294901760
        %2397 = vmatpush1.msra.mxu0 %v2396
        %2398 = vmatprep.subr.mxu0 0.0
        %v2399 = vand.u32 %v1819, 4294901760
        %2400 = vmatpush1.msra.mxu0 %v2399
        %2401 = vmatprep.subr.mxu0 0.0
        %v2402 = vand.u32 %v1820, 4294901760
        %2403 = vmatpush1.msra.mxu0 %v2402
        %2404 = vmatprep.subr.mxu0 0.0
        %v2405 = vand.u32 %v1821, 4294901760
        %2406 = vmatpush1.msra.mxu0 %v2405
        %2407 = vmatprep.subr.mxu0 0.0
        %v2408 = vand.u32 %v1822, 4294901760
        %2409 = vmatpush1.msra.mxu0 %v2408
        %2410 = vmatprep.subr.mxu0 0.0
        %v2411 = vand.u32 %v1823, 4294901760
        %2412 = vmatpush1.msra.mxu0 %v2411
        %2413 = vmatprep.subr.mxu0 0.0
        %v2414 = vand.u32 %v1824, 4294901760
        %2415 = vmatpush1.msra.mxu0 %v2414
        %2416 = vmatprep.subr.mxu0 0.0
        %v2417 = vand.u32 %v1825, 4294901760
        %2418 = vmatpush1.msra.mxu0 %v2417
        %2419 = vmatprep.subr.mxu0 0.0
        %v2420 = vand.u32 %v1826, 4294901760
        %2421 = vmatpush1.msra.mxu0 %v2420
        %2422 = vmatprep.subr.mxu0 0.0
        %v2423 = vand.u32 %v1827, 4294901760
        %2424 = vmatpush1.msra.mxu0 %v2423
        %2425 = vmatprep.subr.mxu0 0.0
        %v2426 = vand.u32 %v1828, 4294901760
        %2427 = vmatpush1.msra.mxu0 %v2426
        %2428 = vmatprep.subr.mxu0 0.0
        %v2429 = vand.u32 %v1829, 4294901760
        %2430 = vmatpush1.msra.mxu0 %v2429
        %2431 = vmatprep.subr.mxu0 0.0
        %v2432 = vand.u32 %v1830, 4294901760
        %2433 = vmatpush1.msra.mxu0 %v2432
        %2434 = vmatprep.subr.mxu0 0.0
        %v2435 = vand.u32 %v1831, 4294901760
        %2436 = vmatpush1.msra.mxu0 %v2435
        %2437 = vmatprep.subr.mxu0 0.0
        %v2438 = vand.u32 %v1832, 4294901760
        %2439 = vmatpush1.msra.mxu0 %v2438
        %2440 = vmatprep.subr.mxu0 0.0
        %v2441 = vand.u32 %v1833, 4294901760
        %2442 = vmatpush1.msra.mxu0 %v2441
        %2443 = vmatprep.subr.mxu0 0.0
        %2444 = vmatpush1.msra.mxu0 0.0
        %2445 = vmatprep.subr.mxu0 0.0
        %2446 = vmatpush1.msra.mxu0 0.0
        %2447 = vmatprep.subr.mxu0 0.0
        %2448 = vmatpush1.msra.mxu0 0.0
        %2449 = vmatprep.subr.mxu0 0.0
        %2450 = vmatpush1.msra.mxu0 0.0
        %2451 = vmatprep.subr.mxu0 0.0
        %2452 = vmatpush1.msra.mxu0 0.0
        %2453 = vmatprep.subr.mxu0 0.0
        %2454 = vmatpush1.msra.mxu0 0.0
        %2455 = vmatprep.subr.mxu0 0.0
        %2456 = vmatpush1.msra.mxu0 0.0
        %2457 = vmatprep.subr.mxu0 0.0
        %2458 = vmatpush1.msra.mxu0 0.0
        %2459 = vmatprep.subr.mxu0 0.0
        %2460 = vmatpush1.msra.mxu0 0.0
        %2461 = vmatprep.subr.mxu0 0.0
        %2462 = vmatpush1.msra.mxu0 0.0
        %2463 = vmatprep.subr.mxu0 0.0
        %2464 = vmatpush1.msra.mxu0 0.0
        %2465 = vmatprep.subr.mxu0 0.0
        %2466 = vmatpush1.msra.mxu0 0.0
        %2467 = vmatprep.subr.mxu0 0.0
        %2468 = vmatpush1.msra.mxu0 0.0
        %2469 = vmatprep.subr.mxu0 0.0
        %2470 = vmatpush1.msra.mxu0 0.0
        %2471 = vmatprep.subr.mxu0 0.0
        %2472 = vmatpush1.msra.mxu0 0.0
        %2473 = vmatprep.subr.mxu0 0.0
        %2474 = vmatpush1.msra.mxu0 0.0
        %2475 = vmatprep.mubr.f32.mxu0 0.0
        %v2476 = vand.u32 %v1817, 4294901760
        %2477 = vmatmul.mubr.f32.gmra.mrb[0].mxu0 %v2476
        %v2478 = vpop.f32.mrb[0].mxu0
        %v2479 = vadd.f32 %v2392, %v2478
        %v2480 = vpop.f32.mrb[0].mxu0
        %2481 = vdwg.mxu0
        %vm2482 = vcmask 80896
        %2483 = vst.msk [vmem:[#allocation3] sm:$0xff] %vm2482, %v2479
        %v2484 = vld [vmem:[#allocation3] ss:$2 sm:$0xf]
        %s2485 = scalar_lea.vmem [#allocation3], 1
        %v2486 = vld [vmem:[%s2485] ss:$2 sm:$0xf]
        %v2487 = vmax.f32 %v2484, %v2486
        %vm2488 = vcmask 76800
        %2489 = vst.msk [vmem:[%s217] sm:$0xf] %vm2488, %v2487
        %s2490 = sand.u32 %s137, 1
        %s2491 = scalar_lea.sflag [#allocation5], %s2490
        %s2492 = sand.u32 %s137, 1
        %s2493 = smul.addr %s2492, 4
        %s2494 = scalar_lea.vmem [#allocation4], %s2493
        // Predicated region
        $region41: #{conv_layers_forward.1} parent=39 // pred_check
          %p2495 = pneg %p147
        $region42: #{conv_layers_forward.1} parent=39 // pred_check_branch
          %2497 = sbr.rel (%p2495) target = $region44
        $region43: #{conv_layers_forward.1} parent=39 // pred_region
          %s2499 = ssub.s32 64, 64
          %2500 = vsyncadd %s2491, %s2499
          %s2501 = smul.addr %s19, 64
          %s2502 = scalar_lea.hbm %s5, %s2501
          %s2504 = sshll.u32 %s2494, 4
          %s2505 = int_to_ptr.vmem [resolvable:$true] %s2504
          %2507 = dma.vmem_to_hbm [thread:$0]  %s2505, 64, %s2502, %s2491
        $region44: #{conv_layers_forward.1} parent=39 // pred_fallthru
          _
      $region40: #{conv_layers_forward.1} parent=5 // pred_fallthru
        _
      %p2508 = scmp.le.s32.totalorder 2, %s14
      // Predicated region
      $region45: #{conv_layers_forward.1} parent=5 // pred_check
        %p2509 = pneg %p2508
      $region46: #{conv_layers_forward.1} parent=5 // pred_check_branch
        %2511 = sbr.rel (%p2509) target = $region48
      $region47: #{conv_layers_forward.1} parent=5 // pred_region
        %s2512 = ssub.s32 %s14, 2
        // Predicated region
        $region49: #{conv_layers_forward.1} parent=47 // pred_check
          %p2513 = pneg %p153
        $region50: #{conv_layers_forward.1} parent=47 // pred_check_branch
          %2515 = sbr.rel (%p2513) target = $region52
        $region51: #{conv_layers_forward.1} parent=47 // pred_region
          %s2516 = sand.u32 %s138, 1
          %s2517 = scalar_lea.sflag [#allocation5], %s2516
          %s2518 = sand.u32 %s138, 1
          %s2519 = smul.addr %s2518, 4
          %s2520 = scalar_lea.vmem [#allocation4], %s2519
          %2521 = dma.done %s2517, 64
        $region52: #{conv_layers_forward.1} parent=47 // pred_fallthru
          _
      $region48: #{conv_layers_forward.1} parent=5 // pred_fallthru
        _
    $region6: #{conv_layers_forward.1} parent=1 // loop_footer
      %s18 = sadd.s32 1, %s14
    $region7: #{conv_layers_forward.1} parent=1 // loop_footer_branch
      %13 = sbr.rel target = $region3
    $region8: #{conv_layers_forward.1} parent=1 // loop_exit
      _
    %2522 = vsyncpa [#allocation5], 1
    %s2523 = scalar_lea.sflag [#allocation5], 1
    %2524 = vsyncpa %s2523, 1

</llo_original>
